<compile_context>
chip_gen: v6e
topology: v6e:2x2x1
jax: 0.10.0
libtpu: 0.0.40
codegen_flags: <defaults>
</compile_context>

<pallas_src>
import functools
import math

import jax
import jax.numpy as jnp
from jax import lax
from jax.experimental import pallas as pl
from jax.experimental.pallas import tpu as pltpu


# Row indices inside the packed "small vectors" input of shape (6, dv).
_BO, _LN1G, _LN1B, _LN2G, _LN2B, _B2 = range(6)


def _layer_norm(x, g, b, eps=1e-5):
    mu = jnp.mean(x, axis=-1, keepdims=True)
    var = jnp.mean((x - mu) ** 2, axis=-1, keepdims=True)
    return (x - mu) * lax.rsqrt(var + eps) * g + b


def _encoder_kernel(heads, dhk, dhv, compute_dtype, approx_recip,
                    k_ref, q_ref, v_ref,
                    wq_ref, wk_ref, wv_ref, wo_ref,
                    w1_ref, b1_ref, w2_ref, vec_ref,
                    o_ref,
                    qp_ref, acc_ref):
    """One (batch, key-tile) grid step of the fused encoder block."""
    cd = compute_dtype
    kt = pl.program_id(1)
    scale = 1.0 / math.sqrt(dhk)  # PyTorch: / sqrt(K_.shape[1]) == sqrt(dk/heads)

    # ---- init (first key tile): project Q once, zero the attention accumulator.
    @pl.when(kt == 0)
    def _():
        qp_ref[...] = jnp.dot(q_ref[...].astype(cd), wq_ref[...],
                              preferred_element_type=jnp.float32).astype(cd)
        acc_ref[...] = jnp.zeros_like(acc_ref)

    # ---- fused full-width K/V projections for this key tile (single MXU matmuls).
    kp = jnp.dot(k_ref[...].astype(cd), wk_ref[...],
                 preferred_element_type=jnp.float32).astype(cd)   # (bk, heads*dhk)
    vp = jnp.dot(v_ref[...].astype(cd), wv_ref[...],
                 preferred_element_type=jnp.float32).astype(cd)   # (bk, heads*dhv)

    # ---- per-head scores + softmax over the QUERY axis (as in F.softmax(y, 1)).
    # `heads` is a small static constant -> this Python loop is unrolled.
    for h in range(heads):
        q_h = qp_ref[:, h * dhk:(h + 1) * dhk]                    # (Sq, dhk)
        k_h = kp[:, h * dhk:(h + 1) * dhk]                        # (bk, dhk)
        v_h = vp[:, h * dhv:(h + 1) * dhv]                        # (bk, dhv)

        # Contract the last dims directly -> no explicit K transpose.
        s = lax.dot_general(q_h, k_h, (((1,), (1,)), ((), ())),
                            preferred_element_type=jnp.float32) * scale  # (Sq, bk)

        # Softmax over axis 0 (queries).  Every key column is fully resident,
        # so per-key-tile softmax is exact even when Sk is tiled.
        s = s - jnp.max(s, axis=0, keepdims=True)
        e = jnp.exp(s)
        z = e * pl.reciprocal(jnp.sum(e, axis=0, keepdims=True), approx=approx_recip)

        # Accumulate the head result into its lane slice of the (Sq, dv)
        # accumulator -> no lane-axis concatenate; Sk tiles simply add up.
        acc_ref[:, h * dhv:(h + 1) * dhv] += jnp.dot(
            z.astype(cd), v_h, preferred_element_type=jnp.float32)

    # ---- finalize (last key tile): WO, residual+LN, FFN, residual+LN.
    @pl.when(kt == pl.num_programs(1) - 1)
    def _():
        bo    = vec_ref[_BO:_BO + 1, :]
        ln1_g = vec_ref[_LN1G:_LN1G + 1, :]
        ln1_b = vec_ref[_LN1B:_LN1B + 1, :]
        ln2_g = vec_ref[_LN2G:_LN2G + 1, :]
        ln2_b = vec_ref[_LN2B:_LN2B + 1, :]
        b2    = vec_ref[_B2:_B2 + 1, :]

        attn = jnp.dot(acc_ref[...].astype(cd), wo_ref[...],
                       preferred_element_type=jnp.float32) + bo
        z1 = _layer_norm(attn + q_ref[...], ln1_g, ln1_b)

        h1 = jnp.dot(z1.astype(cd), w1_ref[...],
                     preferred_element_type=jnp.float32) + b1_ref[...]
        h1 = jnp.maximum(h1, 0.0)
        ff = jnp.dot(h1.astype(cd), w2_ref[...],
                     preferred_element_type=jnp.float32) + b2

        o_ref[...] = _layer_norm(ff + z1, ln2_g, ln2_b).astype(o_ref.dtype)


def encoder_block(keys, queries, values, params, *, heads,
                  block_k=None, compute_dtype=jnp.bfloat16):
    B, Sq, dk = queries.shape
    Bk, Sk, dk2 = keys.shape
    Bv, Sv, dv = values.shape
    assert Bk == B and Bv == B and dk2 == dk and Sv == Sk
    assert dk == dv, "residual connections require dk == dv"
    assert dk % heads == 0 and dv % heads == 0
    dhk, dhv = dk // heads, dv // heads
    hidden = params["w1"].shape[1]

    if block_k is None:
        block_k = min(Sk, 512)
    block_k = min(block_k, Sk)
    assert Sk % block_k == 0, "Sk must be divisible by block_k"
    n_kt = Sk // block_k

    cd = compute_dtype
    f32 = jnp.float32
    # Exact reciprocal on the f32 path (used as a tight structural check);
    # approximate EUP reciprocal on the bf16 fast path.
    approx_recip = jnp.dtype(cd) != jnp.dtype(jnp.float32)

    # Flatten per-head projection weights (heads, d_in, d_head) -> (d_in, heads*d_head)
    # so the Q/K/V projections run as single full-width MXU matmuls; cast matmul
    # weights to the compute dtype at the pallas_call boundary.
    wq_f = jnp.transpose(params["wq"], (1, 0, 2)).reshape(dk, heads * dhk).astype(cd)
    wk_f = jnp.transpose(params["wk"], (1, 0, 2)).reshape(dk, heads * dhk).astype(cd)
    wv_f = jnp.transpose(params["wv"], (1, 0, 2)).reshape(dv, heads * dhv).astype(cd)
    wo = params["wo"].astype(cd)
    w1 = params["w1"].astype(cd)
    w2 = params["w2"].astype(cd)
    b1 = params["b1"].astype(f32)

    # Pack the six dv-wide bias / LayerNorm vectors into one grid-invariant input.
    vecs = jnp.concatenate(
        [params["bo"], params["ln1_g"], params["ln1_b"],
         params["ln2_g"], params["ln2_b"], params["b2"]], axis=0).astype(f32)

    full2d = lambda r, c: pl.BlockSpec((r, c), lambda b, t: (0, 0))

    kernel = functools.partial(_encoder_kernel, heads, dhk, dhv, cd, approx_recip)

    # TODO(synk): the query-axis softmax (F.softmax(y, 1)) couples all Sq rows, so
    # Sq is kept whole per batch; tiling Sq (e.g. a second parallel axis for v7x's
    # two TensorCores) would require online renormalization across Sq tiles.
    return pl.pallas_call(
        kernel,
        out_shape=jax.ShapeDtypeStruct((B, Sq, dv), jnp.float32),
        grid_spec=pltpu.PrefetchScalarGridSpec(
            num_scalar_prefetch=0,
            grid=(B, n_kt),                                   # key-tile (reduction) axis last
            in_specs=[
                pl.BlockSpec((None, block_k, dk), lambda b, t: (b, t, 0)),  # keys
                pl.BlockSpec((None, Sq, dk),      lambda b, t: (b, 0, 0)),  # queries
                pl.BlockSpec((None, block_k, dv), lambda b, t: (b, t, 0)),  # values
                full2d(dk, heads * dhk),      # WQ (flattened over heads)
                full2d(dk, heads * dhk),      # WK
                full2d(dv, heads * dhv),      # WV
                full2d(dv, dv),               # WO
                full2d(dv, hidden),           # W1
                full2d(1, hidden),            # b1
                full2d(hidden, dv),           # W2
                full2d(6, dv),                # packed bO / ln1 / ln2 / b2 vectors
            ],
            out_specs=pl.BlockSpec((None, Sq, dv), lambda b, t: (b, 0, 0)),
            scratch_shapes=[
                pltpu.VMEM((Sq, heads * dhk), cd),     # projected Q (persists across key tiles)
                pltpu.VMEM((Sq, dv), jnp.float32),     # multi-head attention accumulator
            ],
        ),
        compiler_params=pltpu.CompilerParams(
            dimension_semantics=("parallel", "arbitrary"),
            # Re-derive block_k / this limit for production shapes; v7x has only
            # 64 MiB physical VMEM (32 MiB scoped default).
            vmem_limit_bytes=32 * 1024 * 1024,
        ),
    )(keys, queries, values, wq_f, wk_f, wv_f, wo, w1, b1, w2, vecs)


def _reference(keys, queries, values, params, *, heads):
    """Plain-JAX reference mirroring the PyTorch forward, for verification."""
    dk = queries.shape[-1]
    dhk = dk // heads
    outs = []
    for h in range(heads):
        q_ = queries @ params["wq"][h]
        k_ = keys @ params["wk"][h]
        v_ = values @ params["wv"][h]
        y = jnp.einsum("bqd,bkd->bqk", q_, k_) / jnp.sqrt(jnp.float32(dhk))
        z = jax.nn.softmax(y, axis=1)   # softmax over the QUERY axis, as in the PyTorch code
        outs.append(z @ v_)
    attn = jnp.concatenate(outs, axis=2) @ params["wo"] + params["bo"][0]

    def ln(x, g, b):
        mu = jnp.mean(x, -1, keepdims=True)
        var = jnp.mean((x - mu) ** 2, -1, keepdims=True)
        return (x - mu) / jnp.sqrt(var + 1e-5) * g[0] + b[0]

    z = ln(attn + queries, params["ln1_g"], params["ln1_b"])
    ff = jnp.maximum(z @ params["w1"] + params["b1"][0], 0.0) @ params["w2"] + params["b2"][0]
    return ln(ff + z, params["ln2_g"], params["ln2_b"])


def _make_params(key, dk, dv, hidden, heads):
    dhk, dhv = dk // heads, dv // heads
    ks = jax.random.split(key, 9)
    u = lambda k, shape, fan_in: jax.random.uniform(
        k, shape, jnp.float32, -1.0 / math.sqrt(fan_in), 1.0 / math.sqrt(fan_in))
    return {
        "wq": u(ks[0], (heads, dk, dhk), dk),
        "wk": u(ks[1], (heads, dk, dhk), dk),
        "wv": u(ks[2], (heads, dv, dhv), dv),
        "wo": u(ks[3], (dv, dv), dv),
        "bo": u(ks[4], (1, dv), dv),
        "ln1_g": jnp.ones((1, dv), jnp.float32),
        "ln1_b": jnp.zeros((1, dv), jnp.float32),
        "ln2_g": jnp.ones((1, dv), jnp.float32),
        "ln2_b": jnp.zeros((1, dv), jnp.float32),
        "w1": u(ks[5], (dv, hidden), dv),
        "b1": u(ks[6], (1, hidden), dv),
        "w2": u(ks[7], (hidden, dv), hidden),
        "b2": u(ks[8], (1, dv), hidden),
    }


if __name__ == "__main__":
    B, S, dk, dv, hidden, heads = 2, 8, 32, 32, 64, 2
    ks = jax.random.split(jax.random.PRNGKey(0), 8)

    # ---- Test 1: toy shapes, single key tile.
    keys_in = jax.random.normal(ks[0], (B, S, dk), jnp.float32)
    queries = jax.random.normal(ks[1], (B, S, dk), jnp.float32)
    values = jax.random.normal(ks[2], (B, S, dv), jnp.float32)
    params = _make_params(ks[3], dk, dv, hidden, heads)

    ref = _reference(keys_in, queries, values, params, heads=heads)

    # f32 compute path: tight structural check.
    out_f32 = jax.block_until_ready(
        encoder_block(keys_in, queries, values, params, heads=heads,
                      compute_dtype=jnp.float32))
    assert out_f32.shape == (B, S, dv)
    assert jnp.allclose(out_f32, ref, atol=1e-3, rtol=1e-3), \
        float(jnp.max(jnp.abs(out_f32 - ref)))

    # bf16 MXU fast path (with approx EUP reciprocal): loose sanity check.
    out_bf16 = jax.block_until_ready(
        encoder_block(keys_in, queries, values, params, heads=heads,
                      compute_dtype=jnp.bfloat16))
    assert jnp.allclose(out_bf16, ref, atol=1e-1, rtol=1e-1), \
        float(jnp.max(jnp.abs(out_bf16 - ref)))

    # ---- Test 2: longer key/value sequence split across 2 key tiles
    #              (exercises the Sk-tiled accumulation / pl.when init-finalize path).
    Sk2 = 16
    keys2 = jax.random.normal(ks[4], (B, Sk2, dk), jnp.float32)
    values2 = jax.random.normal(ks[5], (B, Sk2, dv), jnp.float32)
    queries2 = jax.random.normal(ks[6], (B, S, dk), jnp.float32)
    params2 = _make_params(ks[7], dk, dv, hidden, heads)

    ref2 = _reference(keys2, queries2, values2, params2, heads=heads)
    out2 = jax.block_until_ready(
        encoder_block(keys2, queries2, values2, params2, heads=heads,
                      block_k=8, compute_dtype=jnp.float32))
    assert jnp.allclose(out2, ref2, atol=1e-3, rtol=1e-3), \
        float(jnp.max(jnp.abs(out2 - ref2)))

    print("KERNEL_OK")
</pallas_src>

<mosaic_0001>
module attributes {stable_mosaic.version = 11 : i64} {
  func.func @_encoder_kernel(%arg0: i32, %arg1: i32, %arg2: memref<1x8x32xf32, #tpu.memory_space<vmem>>, %arg3: memref<1x8x32xf32, #tpu.memory_space<vmem>>, %arg4: memref<1x8x32xf32, #tpu.memory_space<vmem>>, %arg5: memref<32x32xf32, #tpu.memory_space<vmem>>, %arg6: memref<32x32xf32, #tpu.memory_space<vmem>>, %arg7: memref<32x32xf32, #tpu.memory_space<vmem>>, %arg8: memref<32x32xf32, #tpu.memory_space<vmem>>, %arg9: memref<32x64xf32, #tpu.memory_space<vmem>>, %arg10: memref<1x64xf32, #tpu.memory_space<vmem>>, %arg11: memref<64x32xf32, #tpu.memory_space<vmem>>, %arg12: memref<6x32xf32, #tpu.memory_space<vmem>>, %arg13: memref<1x8x32xf32, #tpu.memory_space<vmem>>, %arg14: memref<8x32xf32, #tpu.memory_space<vmem>>, %arg15: memref<8x32xf32, #tpu.memory_space<vmem>>) attributes {dimension_semantics = [#tpu.dimension_semantics<parallel>, #tpu.dimension_semantics<arbitrary>], iteration_bounds = array<i64: 2, 1>, scalar_prefetch = 0 : i64, scratch_operands = 2 : i64, tpu.core_type = #tpu.core_type<tc>, window_params = [{transform_indices = @transform_0, window_bounds = array<i64: 1, 8, 32>}, {transform_indices = @transform_1, window_bounds = array<i64: 1, 8, 32>}, {transform_indices = @transform_2, window_bounds = array<i64: 1, 8, 32>}, {pipeline_mode = #tpu.pipeline_mode<synchronous>, transform_indices = @transform_3, window_bounds = array<i64: 32, 32>}, {pipeline_mode = #tpu.pipeline_mode<synchronous>, transform_indices = @transform_4, window_bounds = array<i64: 32, 32>}, {pipeline_mode = #tpu.pipeline_mode<synchronous>, transform_indices = @transform_5, window_bounds = array<i64: 32, 32>}, {pipeline_mode = #tpu.pipeline_mode<synchronous>, transform_indices = @transform_6, window_bounds = array<i64: 32, 32>}, {pipeline_mode = #tpu.pipeline_mode<synchronous>, transform_indices = @transform_7, window_bounds = array<i64: 32, 64>}, {pipeline_mode = #tpu.pipeline_mode<synchronous>, transform_indices = @transform_8, window_bounds = array<i64: 1, 64>}, {pipeline_mode = #tpu.pipeline_mode<synchronous>, transform_indices = @transform_9, window_bounds = array<i64: 64, 32>}, {pipeline_mode = #tpu.pipeline_mode<synchronous>, transform_indices = @transform_10, window_bounds = array<i64: 6, 32>}, {transform_indices = @transform_11, window_bounds = array<i64: 1, 8, 32>}]} {
    %c0_i32 = arith.constant 0 : i32
    %0 = arith.cmpi eq, %arg1, %c0_i32 : i32
    %1 = arith.extui %0 : i1 to i32
    %c0_i32_0 = arith.constant 0 : i32
    %2 = arith.cmpi ne, %1, %c0_i32_0 : i32
    scf.if %2 {
      %c0_34 = arith.constant 0 : index
      %c0_35 = arith.constant 0 : index
      %c0_36 = arith.constant 0 : index
      %54 = vector.load %arg3[%c0_34, %c0_35, %c0_36] : memref<1x8x32xf32, #tpu.memory_space<vmem>>, vector<1x8x32xf32>
      %55 = vector.shape_cast %54 : vector<1x8x32xf32> to vector<8x32xf32>
      %c0_37 = arith.constant 0 : index
      %c0_38 = arith.constant 0 : index
      %56 = vector.load %arg5[%c0_37, %c0_38] : memref<32x32xf32, #tpu.memory_space<vmem>>, vector<32x32xf32>
      %cst_39 = arith.constant dense<0.000000e+00> : vector<8x32xf32>
      %57 = tpu.matmul %55, %56, %cst_39 {dimension_numbers = #tpu.dot_dimension_numbers<[1], [0], [0], [1], [0, 0, 1, 1], [], []>} : vector<8x32xf32>, vector<32x32xf32>, vector<8x32xf32> -> vector<8x32xf32>
      %c0_40 = arith.constant 0 : index
      %c0_41 = arith.constant 0 : index
      %58 = vector.load %arg14[%c0_40, %c0_41] : memref<8x32xf32, #tpu.memory_space<vmem>>, vector<8x32xf32>
      tpu.vector_store %arg14[%c0_40, %c0_41], %57 {strides = array<i32>} : memref<8x32xf32, #tpu.memory_space<vmem>>, vector<8x32xf32>,
      %cst_42 = arith.constant 0.000000e+00 : f32
      %59 = vector.broadcast %cst_42 : f32 to vector<8x32xf32>
      %c0_43 = arith.constant 0 : index
      %c0_44 = arith.constant 0 : index
      %60 = vector.load %arg15[%c0_43, %c0_44] : memref<8x32xf32, #tpu.memory_space<vmem>>, vector<8x32xf32>
      tpu.vector_store %arg15[%c0_43, %c0_44], %59 {strides = array<i32>} : memref<8x32xf32, #tpu.memory_space<vmem>>, vector<8x32xf32>,
    } else {
    }
    %c0 = arith.constant 0 : index
    %c0_1 = arith.constant 0 : index
    %c0_2 = arith.constant 0 : index
    %3 = vector.load %arg2[%c0, %c0_1, %c0_2] : memref<1x8x32xf32, #tpu.memory_space<vmem>>, vector<1x8x32xf32>
    %4 = vector.shape_cast %3 : vector<1x8x32xf32> to vector<8x32xf32>
    %c0_3 = arith.constant 0 : index
    %c0_4 = arith.constant 0 : index
    %5 = vector.load %arg6[%c0_3, %c0_4] : memref<32x32xf32, #tpu.memory_space<vmem>>, vector<32x32xf32>
    %cst = arith.constant dense<0.000000e+00> : vector<8x32xf32>
    %6 = tpu.matmul %4, %5, %cst {dimension_numbers = #tpu.dot_dimension_numbers<[1], [0], [0], [1], [0, 0, 1, 1], [], []>} : vector<8x32xf32>, vector<32x32xf32>, vector<8x32xf32> -> vector<8x32xf32>
    %c0_5 = arith.constant 0 : index
    %c0_6 = arith.constant 0 : index
    %c0_7 = arith.constant 0 : index
    %7 = vector.load %arg4[%c0_5, %c0_6, %c0_7] : memref<1x8x32xf32, #tpu.memory_space<vmem>>, vector<1x8x32xf32>
    %8 = vector.shape_cast %7 : vector<1x8x32xf32> to vector<8x32xf32>
    %c0_8 = arith.constant 0 : index
    %c0_9 = arith.constant 0 : index
    %9 = vector.load %arg7[%c0_8, %c0_9] : memref<32x32xf32, #tpu.memory_space<vmem>>, vector<32x32xf32>
    %cst_10 = arith.constant dense<0.000000e+00> : vector<8x32xf32>
    %10 = tpu.matmul %8, %9, %cst_10 {dimension_numbers = #tpu.dot_dimension_numbers<[1], [0], [0], [1], [0, 0, 1, 1], [], []>} : vector<8x32xf32>, vector<32x32xf32>, vector<8x32xf32> -> vector<8x32xf32>
    %c0_11 = arith.constant 0 : index
    %c0_12 = arith.constant 0 : index
    %11 = vector.load %arg14[%c0_11, %c0_12] : memref<8x32xf32, #tpu.memory_space<vmem>>, vector<8x16xf32>
    %12 = vector.extract_strided_slice %6 {offsets = [0, 0], sizes = [8, 16], strides = [1, 1]} : vector<8x32xf32> to vector<8x16xf32>
    %13 = vector.extract_strided_slice %10 {offsets = [0, 0], sizes = [8, 16], strides = [1, 1]} : vector<8x32xf32> to vector<8x16xf32>
    %cst_13 = arith.constant dense<0.000000e+00> : vector<8x8xf32>
    %14 = tpu.matmul %11, %12, %cst_13 {dimension_numbers = #tpu.dot_dimension_numbers<[1], [1], [0], [0], [0, 0, 1, 0], [], []>} : vector<8x16xf32>, vector<8x16xf32>, vector<8x8xf32> -> vector<8x8xf32>
    %cst_14 = arith.constant 2.500000e-01 : f32
    %15 = vector.broadcast %cst_14 : f32 to vector<8x8xf32>
    %16 = arith.mulf %14, %15 : vector<8x8xf32>
    %cst_15 = arith.constant dense<0xFF800000> : vector<8xf32>
    %17 = vector.multi_reduction <maximumf>, %16, %cst_15 [0] : vector<8x8xf32> to vector<8xf32>
    %18 = vector.shape_cast %17 : vector<8xf32> to vector<1x8xf32>
    %19 = vector.broadcast %18 : vector<1x8xf32> to vector<8x8xf32>
    %20 = arith.subf %16, %19 : vector<8x8xf32>
    %21 = math.exp %20 : vector<8x8xf32>
    %cst_16 = arith.constant dense<0.000000e+00> : vector<8xf32>
    %22 = vector.multi_reduction <add>, %21, %cst_16 [0] : vector<8x8xf32> to vector<8xf32>
    %23 = vector.shape_cast %22 : vector<8xf32> to vector<1x8xf32>
    %24 = tpu.reciprocal %23 : vector<1x8xf32> -> vector<1x8xf32>
    %25 = vector.broadcast %24 : vector<1x8xf32> to vector<8x8xf32>
    %26 = arith.mulf %21, %25 : vector<8x8xf32>
    %c0_17 = arith.constant 0 : index
    %c0_18 = arith.constant 0 : index
    %27 = vector.load %arg15[%c0_17, %c0_18] : memref<8x32xf32, #tpu.memory_space<vmem>>, vector<8x16xf32>
    %cst_19 = arith.constant dense<0.000000e+00> : vector<8x16xf32>
    %28 = tpu.matmul %26, %13, %cst_19 {dimension_numbers = #tpu.dot_dimension_numbers<[1], [0], [0], [1], [0, 0, 1, 1], [], []>} : vector<8x8xf32>, vector<8x16xf32>, vector<8x16xf32> -> vector<8x16xf32>
    %29 = arith.addf %27, %28 : vector<8x16xf32>
    %c0_20 = arith.constant 0 : index
    %c0_21 = arith.constant 0 : index
    %30 = vector.load %arg15[%c0_20, %c0_21] : memref<8x32xf32, #tpu.memory_space<vmem>>, vector<8x16xf32>
    tpu.vector_store %arg15[%c0_20, %c0_21], %29 {strides = array<i32>} : memref<8x32xf32, #tpu.memory_space<vmem>>, vector<8x16xf32>,
    %c0_22 = arith.constant 0 : index
    %c16 = arith.constant 16 : index
    %31 = vector.load %arg14[%c0_22, %c16] : memref<8x32xf32, #tpu.memory_space<vmem>>, vector<8x16xf32>
    %32 = vector.extract_strided_slice %6 {offsets = [0, 16], sizes = [8, 16], strides = [1, 1]} : vector<8x32xf32> to vector<8x16xf32>
    %33 = vector.extract_strided_slice %10 {offsets = [0, 16], sizes = [8, 16], strides = [1, 1]} : vector<8x32xf32> to vector<8x16xf32>
    %cst_23 = arith.constant dense<0.000000e+00> : vector<8x8xf32>
    %34 = tpu.matmul %31, %32, %cst_23 {dimension_numbers = #tpu.dot_dimension_numbers<[1], [1], [0], [0], [0, 0, 1, 0], [], []>} : vector<8x16xf32>, vector<8x16xf32>, vector<8x8xf32> -> vector<8x8xf32>
    %cst_24 = arith.constant 2.500000e-01 : f32
    %35 = vector.broadcast %cst_24 : f32 to vector<8x8xf32>
    %36 = arith.mulf %34, %35 : vector<8x8xf32>
    %cst_25 = arith.constant dense<0xFF800000> : vector<8xf32>
    %37 = vector.multi_reduction <maximumf>, %36, %cst_25 [0] : vector<8x8xf32> to vector<8xf32>
    %38 = vector.shape_cast %37 : vector<8xf32> to vector<1x8xf32>
    %39 = vector.broadcast %38 : vector<1x8xf32> to vector<8x8xf32>
    %40 = arith.subf %36, %39 : vector<8x8xf32>
    %41 = math.exp %40 : vector<8x8xf32>
    %cst_26 = arith.constant dense<0.000000e+00> : vector<8xf32>
    %42 = vector.multi_reduction <add>, %41, %cst_26 [0] : vector<8x8xf32> to vector<8xf32>
    %43 = vector.shape_cast %42 : vector<8xf32> to vector<1x8xf32>
    %44 = tpu.reciprocal %43 : vector<1x8xf32> -> vector<1x8xf32>
    %45 = vector.broadcast %44 : vector<1x8xf32> to vector<8x8xf32>
    %46 = arith.mulf %41, %45 : vector<8x8xf32>
    %c0_27 = arith.constant 0 : index
    %c16_28 = arith.constant 16 : index
    %47 = vector.load %arg15[%c0_27, %c16_28] : memref<8x32xf32, #tpu.memory_space<vmem>>, vector<8x16xf32>
    %cst_29 = arith.constant dense<0.000000e+00> : vector<8x16xf32>
    %48 = tpu.matmul %46, %33, %cst_29 {dimension_numbers = #tpu.dot_dimension_numbers<[1], [0], [0], [1], [0, 0, 1, 1], [], []>} : vector<8x8xf32>, vector<8x16xf32>, vector<8x16xf32> -> vector<8x16xf32>
    %49 = arith.addf %47, %48 : vector<8x16xf32>
    %c0_30 = arith.constant 0 : index
    %c16_31 = arith.constant 16 : index
    %50 = vector.load %arg15[%c0_30, %c16_31] : memref<8x32xf32, #tpu.memory_space<vmem>>, vector<8x16xf32>
    tpu.vector_store %arg15[%c0_30, %c16_31], %49 {strides = array<i32>} : memref<8x32xf32, #tpu.memory_space<vmem>>, vector<8x16xf32>,
    %c0_i32_32 = arith.constant 0 : i32
    %51 = arith.cmpi eq, %arg1, %c0_i32_32 : i32
    %52 = arith.extui %51 : i1 to i32
    %c0_i32_33 = arith.constant 0 : i32
    %53 = arith.cmpi ne, %52, %c0_i32_33 : i32
    scf.if %53 {
      %c0_34 = arith.constant 0 : index
      %c0_35 = arith.constant 0 : index
      %54 = vector.load %arg12[%c0_34, %c0_35] : memref<6x32xf32, #tpu.memory_space<vmem>>, vector<1x32xf32>
      %c1 = arith.constant 1 : index
      %c0_36 = arith.constant 0 : index
      %55 = vector.load %arg12[%c1, %c0_36] : memref<6x32xf32, #tpu.memory_space<vmem>>, vector<1x32xf32>
      %c2 = arith.constant 2 : index
      %c0_37 = arith.constant 0 : index
      %56 = vector.load %arg12[%c2, %c0_37] : memref<6x32xf32, #tpu.memory_space<vmem>>, vector<1x32xf32>
      %c3 = arith.constant 3 : index
      %c0_38 = arith.constant 0 : index
      %57 = vector.load %arg12[%c3, %c0_38] : memref<6x32xf32, #tpu.memory_space<vmem>>, vector<1x32xf32>
      %c4 = arith.constant 4 : index
      %c0_39 = arith.constant 0 : index
      %58 = vector.load %arg12[%c4, %c0_39] : memref<6x32xf32, #tpu.memory_space<vmem>>, vector<1x32xf32>
      %c5 = arith.constant 5 : index
      %c0_40 = arith.constant 0 : index
      %59 = vector.load %arg12[%c5, %c0_40] : memref<6x32xf32, #tpu.memory_space<vmem>>, vector<1x32xf32>
      %c0_41 = arith.constant 0 : index
      %c0_42 = arith.constant 0 : index
      %60 = vector.load %arg15[%c0_41, %c0_42] : memref<8x32xf32, #tpu.memory_space<vmem>>, vector<8x32xf32>
      %c0_43 = arith.constant 0 : index
      %c0_44 = arith.constant 0 : index
      %61 = vector.load %arg8[%c0_43, %c0_44] : memref<32x32xf32, #tpu.memory_space<vmem>>, vector<32x32xf32>
      %cst_45 = arith.constant dense<0.000000e+00> : vector<8x32xf32>
      %62 = tpu.matmul %60, %61, %cst_45 {dimension_numbers = #tpu.dot_dimension_numbers<[1], [0], [0], [1], [0, 0, 1, 1], [], []>} : vector<8x32xf32>, vector<32x32xf32>, vector<8x32xf32> -> vector<8x32xf32>
      %63 = vector.broadcast %54 : vector<1x32xf32> to vector<8x32xf32>
      %64 = arith.addf %62, %63 : vector<8x32xf32>
      %c0_46 = arith.constant 0 : index
      %c0_47 = arith.constant 0 : index
      %c0_48 = arith.constant 0 : index
      %65 = vector.load %arg3[%c0_46, %c0_47, %c0_48] : memref<1x8x32xf32, #tpu.memory_space<vmem>>, vector<1x8x32xf32>
      %66 = vector.shape_cast %65 : vector<1x8x32xf32> to vector<8x32xf32>
      %67 = arith.addf %64, %66 : vector<8x32xf32>
      %cst_49 = arith.constant dense<0.000000e+00> : vector<8xf32>
      %68 = vector.multi_reduction <add>, %67, %cst_49 [1] : vector<8x32xf32> to vector<8xf32>
      %69 = vector.shape_cast %68 : vector<8xf32> to vector<8x1xf32>
      %cst_50 = arith.constant 3.200000e+01 : f32
      %70 = vector.broadcast %cst_50 : f32 to vector<8x1xf32>
      %71 = arith.divf %69, %70 : vector<8x1xf32>
      %72 = vector.broadcast %71 : vector<8x1xf32> to vector<8x32xf32>
      %73 = arith.subf %67, %72 : vector<8x32xf32>
      %74 = arith.mulf %73, %73 : vector<8x32xf32>
      %cst_51 = arith.constant dense<0.000000e+00> : vector<8xf32>
      %75 = vector.multi_reduction <add>, %74, %cst_51 [1] : vector<8x32xf32> to vector<8xf32>
      %76 = vector.shape_cast %75 : vector<8xf32> to vector<8x1xf32>
      %cst_52 = arith.constant 3.200000e+01 : f32
      %77 = vector.broadcast %cst_52 : f32 to vector<8x1xf32>
      %78 = arith.divf %76, %77 : vector<8x1xf32>
      %79 = vector.broadcast %71 : vector<8x1xf32> to vector<8x32xf32>
      %80 = arith.subf %67, %79 : vector<8x32xf32>
      %cst_53 = arith.constant 9.99999974E-6 : f32
      %81 = vector.broadcast %cst_53 : f32 to vector<8x1xf32>
      %82 = arith.addf %78, %81 : vector<8x1xf32>
      %83 = math.rsqrt %82 : vector<8x1xf32>
      %84 = vector.broadcast %83 : vector<8x1xf32> to vector<8x32xf32>
      %85 = arith.mulf %80, %84 : vector<8x32xf32>
      %86 = vector.broadcast %55 : vector<1x32xf32> to vector<8x32xf32>
      %87 = arith.mulf %85, %86 : vector<8x32xf32>
      %88 = vector.broadcast %56 : vector<1x32xf32> to vector<8x32xf32>
      %89 = arith.addf %87, %88 : vector<8x32xf32>
      %c0_54 = arith.constant 0 : index
      %c0_55 = arith.constant 0 : index
      %90 = vector.load %arg9[%c0_54, %c0_55] : memref<32x64xf32, #tpu.memory_space<vmem>>, vector<32x64xf32>
      %cst_56 = arith.constant dense<0.000000e+00> : vector<8x64xf32>
      %91 = tpu.matmul %89, %90, %cst_56 {dimension_numbers = #tpu.dot_dimension_numbers<[1], [0], [0], [1], [0, 0, 1, 1], [], []>} : vector<8x32xf32>, vector<32x64xf32>, vector<8x64xf32> -> vector<8x64xf32>
      %c0_57 = arith.constant 0 : index
      %c0_58 = arith.constant 0 : index
      %92 = vector.load %arg10[%c0_57, %c0_58] : memref<1x64xf32, #tpu.memory_space<vmem>>, vector<1x64xf32>
      %93 = vector.broadcast %92 : vector<1x64xf32> to vector<8x64xf32>
      %94 = arith.addf %91, %93 : vector<8x64xf32>
      %cst_59 = arith.constant 0.000000e+00 : f32
      %95 = vector.broadcast %cst_59 : f32 to vector<8x64xf32>
      %96 = arith.maximumf %94, %95 : vector<8x64xf32>
      %c0_60 = arith.constant 0 : index
      %c0_61 = arith.constant 0 : index
      %97 = vector.load %arg11[%c0_60, %c0_61] : memref<64x32xf32, #tpu.memory_space<vmem>>, vector<64x32xf32>
      %cst_62 = arith.constant dense<0.000000e+00> : vector<8x32xf32>
      %98 = tpu.matmul %96, %97, %cst_62 {dimension_numbers = #tpu.dot_dimension_numbers<[1], [0], [0], [1], [0, 0, 1, 1], [], []>} : vector<8x64xf32>, vector<64x32xf32>, vector<8x32xf32> -> vector<8x32xf32>
      %99 = vector.broadcast %59 : vector<1x32xf32> to vector<8x32xf32>
      %100 = arith.addf %98, %99 : vector<8x32xf32>
      %101 = arith.addf %100, %89 : vector<8x32xf32>
      %cst_63 = arith.constant dense<0.000000e+00> : vector<8xf32>
      %102 = vector.multi_reduction <add>, %101, %cst_63 [1] : vector<8x32xf32> to vector<8xf32>
      %103 = vector.shape_cast %102 : vector<8xf32> to vector<8x1xf32>
      %cst_64 = arith.constant 3.200000e+01 : f32
      %104 = vector.broadcast %cst_64 : f32 to vector<8x1xf32>
      %105 = arith.divf %103, %104 : vector<8x1xf32>
      %106 = vector.broadcast %105 : vector<8x1xf32> to vector<8x32xf32>
      %107 = arith.subf %101, %106 : vector<8x32xf32>
      %108 = arith.mulf %107, %107 : vector<8x32xf32>
      %cst_65 = arith.constant dense<0.000000e+00> : vector<8xf32>
      %109 = vector.multi_reduction <add>, %108, %cst_65 [1] : vector<8x32xf32> to vector<8xf32>
      %110 = vector.shape_cast %109 : vector<8xf32> to vector<8x1xf32>
      %cst_66 = arith.constant 3.200000e+01 : f32
      %111 = vector.broadcast %cst_66 : f32 to vector<8x1xf32>
      %112 = arith.divf %110, %111 : vector<8x1xf32>
      %113 = vector.broadcast %105 : vector<8x1xf32> to vector<8x32xf32>
      %114 = arith.subf %101, %113 : vector<8x32xf32>
      %cst_67 = arith.constant 9.99999974E-6 : f32
      %115 = vector.broadcast %cst_67 : f32 to vector<8x1xf32>
      %116 = arith.addf %112, %115 : vector<8x1xf32>
      %117 = math.rsqrt %116 : vector<8x1xf32>
      %118 = vector.broadcast %117 : vector<8x1xf32> to vector<8x32xf32>
      %119 = arith.mulf %114, %118 : vector<8x32xf32>
      %120 = vector.broadcast %57 : vector<1x32xf32> to vector<8x32xf32>
      %121 = arith.mulf %119, %120 : vector<8x32xf32>
      %122 = vector.broadcast %58 : vector<1x32xf32> to vector<8x32xf32>
      %123 = arith.addf %121, %122 : vector<8x32xf32>
      %c0_68 = arith.constant 0 : index
      %c0_69 = arith.constant 0 : index
      %c0_70 = arith.constant 0 : index
      %124 = vector.load %arg13[%c0_68, %c0_69, %c0_70] : memref<1x8x32xf32, #tpu.memory_space<vmem>>, vector<1x8x32xf32>
      %125 = vector.shape_cast %124 : vector<1x8x32xf32> to vector<8x32xf32>
      %126 = vector.shape_cast %123 : vector<8x32xf32> to vector<1x8x32xf32>
      tpu.vector_store %arg13[%c0_68, %c0_69, %c0_70], %126 {strides = array<i32>} : memref<1x8x32xf32, #tpu.memory_space<vmem>>, vector<1x8x32xf32>,
    } else {
    }
    return
  }
  func.func @transform_0(%arg0: i32, %arg1: i32) -> (i32, i32, i32) {
    %c0_i32 = arith.constant 0 : i32
    %c0_i32_0 = arith.constant 0 : i32
    return %arg0, %arg1, %c0_i32 : i32, i32, i32
  }
  func.func @transform_1(%arg0: i32, %arg1: i32) -> (i32, i32, i32) {
    %c0_i32 = arith.constant 0 : i32
    %c0_i32_0 = arith.constant 0 : i32
    %c0_i32_1 = arith.constant 0 : i32
    return %arg0, %c0_i32, %c0_i32_0 : i32, i32, i32
  }
  func.func @transform_2(%arg0: i32, %arg1: i32) -> (i32, i32, i32) {
    %c0_i32 = arith.constant 0 : i32
    %c0_i32_0 = arith.constant 0 : i32
    return %arg0, %arg1, %c0_i32 : i32, i32, i32
  }
  func.func @transform_3(%arg0: i32, %arg1: i32) -> (i32, i32) {
    %c0_i32 = arith.constant 0 : i32
    %c0_i32_0 = arith.constant 0 : i32
    %c0_i32_1 = arith.constant 0 : i32
    return %c0_i32, %c0_i32_0 : i32, i32
  }
  func.func @transform_4(%arg0: i32, %arg1: i32) -> (i32, i32) {
    %c0_i32 = arith.constant 0 : i32
    %c0_i32_0 = arith.constant 0 : i32
    %c0_i32_1 = arith.constant 0 : i32
    return %c0_i32, %c0_i32_0 : i32, i32
  }
  func.func @transform_5(%arg0: i32, %arg1: i32) -> (i32, i32) {
    %c0_i32 = arith.constant 0 : i32
    %c0_i32_0 = arith.constant 0 : i32
    %c0_i32_1 = arith.constant 0 : i32
    return %c0_i32, %c0_i32_0 : i32, i32
  }
  func.func @transform_6(%arg0: i32, %arg1: i32) -> (i32, i32) {
    %c0_i32 = arith.constant 0 : i32
    %c0_i32_0 = arith.constant 0 : i32
    %c0_i32_1 = arith.constant 0 : i32
    return %c0_i32, %c0_i32_0 : i32, i32
  }
  func.func @transform_7(%arg0: i32, %arg1: i32) -> (i32, i32) {
    %c0_i32 = arith.constant 0 : i32
    %c0_i32_0 = arith.constant 0 : i32
    %c0_i32_1 = arith.constant 0 : i32
    return %c0_i32, %c0_i32_0 : i32, i32
  }
  func.func @transform_8(%arg0: i32, %arg1: i32) -> (i32, i32) {
    %c0_i32 = arith.constant 0 : i32
    %c0_i32_0 = arith.constant 0 : i32
    %c0_i32_1 = arith.constant 0 : i32
    return %c0_i32, %c0_i32_0 : i32, i32
  }
  func.func @transform_9(%arg0: i32, %arg1: i32) -> (i32, i32) {
    %c0_i32 = arith.constant 0 : i32
    %c0_i32_0 = arith.constant 0 : i32
    %c0_i32_1 = arith.constant 0 : i32
    return %c0_i32, %c0_i32_0 : i32, i32
  }
  func.func @transform_10(%arg0: i32, %arg1: i32) -> (i32, i32) {
    %c0_i32 = arith.constant 0 : i32
    %c0_i32_0 = arith.constant 0 : i32
    %c0_i32_1 = arith.constant 0 : i32
    return %c0_i32, %c0_i32_0 : i32, i32
  }
  func.func @transform_11(%arg0: i32, %arg1: i32) -> (i32, i32, i32) {
    %c0_i32 = arith.constant 0 : i32
    %c0_i32_0 = arith.constant 0 : i32
    %c0_i32_1 = arith.constant 0 : i32
    return %arg0, %c0_i32, %c0_i32_0 : i32, i32, i32
  }
}

</mosaic_0001>

<llo_original>
// kernel: tpu_custom_call.1
$region0: #{tpu_custom_call.1}
  #allocation0 [shape = 'u32[]', space=smem, size = 0x4, offset = 0x4, fixed_abs, tag = 'smem constant byte address 0x4 - core index']
  #allocation1 [shape = 'u32[144,128]{1,0:T(1,128)}', space=vmem, size = 0x12000, scoped, tag = 'internal scratch']
  #allocation2 [shape = 'f32[8,32]{1,0:T(8,128)}', space=vmem, size = 0x1000, scoped, tag = 'scratch operand']
  #allocation3 [shape = 'f32[8,32]{1,0:T(8,128)}', space=vmem, size = 0x1000, scoped, tag = 'scratch operand']
  %s0 = inlined_call_operand.hbm [shape: f32[2,8,32], index: 0, kind: input, shape index: {}]
  %s1 = inlined_call_operand.hbm [shape: f32[2,8,32], index: 1, kind: input, shape index: {}]
  %s2 = inlined_call_operand.hbm [shape: f32[2,8,32], index: 2, kind: input, shape index: {}]
  %s3 = inlined_call_operand.vmem [shape: f32[32,32], index: 3, kind: input, shape index: {}]
  %s4 = inlined_call_operand.vmem [shape: f32[32,32], index: 4, kind: input, shape index: {}]
  %s5 = inlined_call_operand.vmem [shape: f32[32,32], index: 5, kind: input, shape index: {}]
  %s6 = inlined_call_operand.hbm [shape: f32[32,32], index: 6, kind: input, shape index: {}]
  %s7 = inlined_call_operand.hbm [shape: f32[32,64], index: 7, kind: input, shape index: {}]
  %s8 = inlined_call_operand.vmem [shape: f32[1,64], index: 8, kind: input, shape index: {}]
  %s9 = inlined_call_operand.vmem [shape: f32[64,32], index: 9, kind: input, shape index: {}]
  %s10 = inlined_call_operand.vmem [shape: f32[6,32], index: 10, kind: input, shape index: {}]
  %s11 = inlined_call_operand.hbm [shape: f32[2,8,32], index: 11, kind: output, shape index: {}]
  %s12 = sld [smem:[#allocation0]]
  $region105: #{tpu_custom_call.1} parent=0
    _
  %s14 = ssub.s32 1, %s12
  %s15 = scalar_select 0, %s14, %s12
  $region1: #{tpu_custom_call.1} parent=0
    #allocation4 [shape = 'u8[8192]{0}', space=vmem, size = 0x2000, scoped, tag = 'input window, operand 0']
    #allocation5 [shape = 's32[2]{0}', space=sflag, size = 0x8, scoped, tag = 'scoped memory for tpu_custom_call.1']
    #allocation6 [shape = 's32[2]{0}', space=sflag, size = 0x8, scoped, tag = 'scoped memory for tpu_custom_call.1']
    #allocation7 [shape = 'u8[8192]{0}', space=vmem, size = 0x2000, scoped, tag = 'input window, operand 1']
    #allocation8 [shape = 's32[2]{0}', space=sflag, size = 0x8, scoped, tag = 'scoped memory for tpu_custom_call.1']
    #allocation9 [shape = 'u8[8192]{0}', space=vmem, size = 0x2000, scoped, tag = 'input window, operand 2']
    #allocation10 [shape = 'u8[16384]{0}', space=vmem, size = 0x4000, scoped, tag = 'input window, operand 6, single buffered']
    #allocation11 [shape = 's32[1]{0}', space=sflag, size = 0x4, scoped, tag = 'scoped memory for tpu_custom_call.1']
    #allocation12 [shape = 'u8[16384]{0}', space=vmem, size = 0x4000, scoped, tag = 'input window, operand 7, single buffered']
    #allocation13 [shape = 'u8[8192]{0}', space=vmem, size = 0x2000, scoped, tag = 'output window, operand 0']
    %16 = vsyncpa [#allocation5], 0
    %s17 = scalar_lea.sflag [#allocation5], 1
    %18 = vsyncpa %s17, 0
    %19 = vsyncpa [#allocation8], 0
    %s20 = scalar_lea.sflag [#allocation8], 1
    %21 = vsyncpa %s20, 0
    %22 = vsyncpa [#allocation11], 0
    %23 = vsyncpa [#allocation6], 0
    %s24 = scalar_lea.sflag [#allocation6], 1
    %25 = vsyncpa %s24, 0
    loop: start=0, step=1, limit=4
    $region2: #{tpu_custom_call.1} parent=1 // loop_pre_header
      _
    $region3: #{tpu_custom_call.1} parent=1 // loop_header
      %s27 = sphi 0, %s31
      %p28 = scmp.ge.s32.totalorder %s27, 4
      %s34 = sphi 0, %s46
      %s35 = sphi 0, %s42
      %s36 = sphi 0, %s34
      %s37 = sphi 0, %s35
      %s38 = sphi 0, %s36
      %s39 = sphi 0, %s37
      %s51 = sphi 0, %s53
      %s54 = sphi 0, %s51
      %s55 = sphi 0, %s54
      %s71 = sphi 0, %s55
      %s77 = sphi 0, %s79
      %s80 = sphi 0, %s77
      %s81 = sphi 0, %s80
      %s97 = sphi 0, %s81
      %s105 = sphi 0, %s107
      %s108 = sphi 0, %s105
      %s109 = sphi 0, %s108
      %s125 = sphi 0, %s109
      %s129 = sphi 0, %s129
      %s131 = sphi 0, %s129
      %s132 = sphi 0, %s131
      %s146 = sphi 0, %s132
      %s150 = sphi 0, %s150
      %s152 = sphi 0, %s150
      %s153 = sphi 0, %s152
      %s167 = sphi 0, %s153
      %s171 = sphi 0, %s171
      %s173 = sphi 0, %s171
      %s174 = sphi 0, %s173
      %s188 = sphi 0, %s174
      %s192 = sphi 0, %s192
      %s194 = sphi 0, %s192
      %s195 = sphi 0, %s194
      %s209 = sphi 0, %s195
      %s213 = sphi 0, %s213
      %s215 = sphi 0, %s213
      %s216 = sphi 0, %s215
      %s230 = sphi 0, %s216
      %s234 = sphi 0, %s234
      %s236 = sphi 0, %s234
      %s237 = sphi 0, %s236
      %s251 = sphi 0, %s237
      %s255 = sphi 0, %s255
      %s257 = sphi 0, %s255
      %s258 = sphi 0, %s257
      %s272 = sphi 0, %s258
      %s276 = sphi 0, %s276
      %s278 = sphi 0, %s276
      %s279 = sphi 0, %s278
      %s293 = sphi 0, %s279
      %s299 = sphi 0, %s301
      %s302 = sphi 0, %s299
      %s303 = sphi 0, %s302
      %s319 = sphi 0, %s303
    $region4: #{tpu_custom_call.1} parent=1 // loop_header_branch
      %30 = sbr.rel (%p28) target = $region8
    $region5: #{tpu_custom_call.1} parent=1 // loop_body
      %s32 = ssub.s32 %s27, 1
      %s33 = ssub.s32 %s27, 2
      %s40 = sadd.s32 1, %s35
      %p41 = scmp.ge.s32.totalorder %s40, 1
      %s42 = scalar_select %p41, 0, %s40
      %s43 = sadd.s32 1, %s34
      %s44 = scalar_select %p41, %s43, %s34
      %p45 = scmp.ge.s32.totalorder %s44, 2
      %s46 = scalar_select %p45, 0, %s44
      %s47 = ssub.s32 %s34, %s46
      %s48 = ssub.s32 %s35, %s42
      %s49 = sor.u32 %s47, %s48
      %p50 = scmp.eq.s32.totalorder %s49, 0
      %s52 = sadd.s32 %s51, 1
      %s53 = scalar_select %p50, %s51, %s52
      %p56 = pneg %p50
      %p57 = scmp.eq.s32.totalorder %s27, 1
      %p58 = por %p56, %p57
      %p59 = scmp.ne.s32.totalorder %s51, %s54
      %p60 = scmp.eq.s32.totalorder %s27, 0
      %p61 = por %p59, %p60
      %p62 = scmp.ne.s32.totalorder %s51, %s54
      %p63 = scmp.eq.s32.totalorder %s32, 1
      %p64 = por %p62, %p63
      %p65 = scmp.ne.s32.totalorder %s54, %s55
      %p66 = scmp.eq.s32.totalorder %s32, 0
      %p67 = por %p65, %p66
      %p68 = scmp.ne.s32.totalorder %s54, %s55
      %p69 = scmp.eq.s32.totalorder %s33, 1
      %p70 = por %p68, %p69
      %p72 = scmp.ne.s32.totalorder %s55, %s71
      %p73 = scmp.eq.s32.totalorder %s33, 0
      %p74 = por %p72, %p73
      %s75 = ssub.s32 %s34, %s46
      %p76 = scmp.eq.s32.totalorder %s75, 0
      %s78 = sadd.s32 %s77, 1
      %s79 = scalar_select %p76, %s77, %s78
      %p82 = pneg %p76
      %p83 = scmp.eq.s32.totalorder %s27, 1
      %p84 = por %p82, %p83
      %p85 = scmp.ne.s32.totalorder %s77, %s80
      %p86 = scmp.eq.s32.totalorder %s27, 0
      %p87 = por %p85, %p86
      %p88 = scmp.ne.s32.totalorder %s77, %s80
      %p89 = scmp.eq.s32.totalorder %s32, 1
      %p90 = por %p88, %p89
      %p91 = scmp.ne.s32.totalorder %s80, %s81
      %p92 = scmp.eq.s32.totalorder %s32, 0
      %p93 = por %p91, %p92
      %p94 = scmp.ne.s32.totalorder %s80, %s81
      %p95 = scmp.eq.s32.totalorder %s33, 1
      %p96 = por %p94, %p95
      %p98 = scmp.ne.s32.totalorder %s81, %s97
      %p99 = scmp.eq.s32.totalorder %s33, 0
      %p100 = por %p98, %p99
      %s101 = ssub.s32 %s34, %s46
      %s102 = ssub.s32 %s35, %s42
      %s103 = sor.u32 %s101, %s102
      %p104 = scmp.eq.s32.totalorder %s103, 0
      %s106 = sadd.s32 %s105, 1
      %s107 = scalar_select %p104, %s105, %s106
      %p110 = pneg %p104
      %p111 = scmp.eq.s32.totalorder %s27, 1
      %p112 = por %p110, %p111
      %p113 = scmp.ne.s32.totalorder %s105, %s108
      %p114 = scmp.eq.s32.totalorder %s27, 0
      %p115 = por %p113, %p114
      %p116 = scmp.ne.s32.totalorder %s105, %s108
      %p117 = scmp.eq.s32.totalorder %s32, 1
      %p118 = por %p116, %p117
      %p119 = scmp.ne.s32.totalorder %s108, %s109
      %p120 = scmp.eq.s32.totalorder %s32, 0
      %p121 = por %p119, %p120
      %p122 = scmp.ne.s32.totalorder %s108, %s109
      %p123 = scmp.eq.s32.totalorder %s33, 1
      %p124 = por %p122, %p123
      %p126 = scmp.ne.s32.totalorder %s109, %s125
      %p127 = scmp.eq.s32.totalorder %s33, 0
      %p128 = por %p126, %p127
      %s130 = sadd.s32 %s129, 1
      %p133 = scmp.eq.s32.totalorder %s27, 1
      %p134 = scmp.ne.s32.totalorder %s129, %s131
      %p135 = scmp.eq.s32.totalorder %s27, 0
      %p136 = por %p134, %p135
      %p137 = scmp.ne.s32.totalorder %s129, %s131
      %p138 = scmp.eq.s32.totalorder %s32, 1
      %p139 = por %p137, %p138
      %p140 = scmp.ne.s32.totalorder %s131, %s132
      %p141 = scmp.eq.s32.totalorder %s32, 0
      %p142 = por %p140, %p141
      %p143 = scmp.ne.s32.totalorder %s131, %s132
      %p144 = scmp.eq.s32.totalorder %s33, 1
      %p145 = por %p143, %p144
      %p147 = scmp.ne.s32.totalorder %s132, %s146
      %p148 = scmp.eq.s32.totalorder %s33, 0
      %p149 = por %p147, %p148
      %s151 = sadd.s32 %s150, 1
      %p154 = scmp.eq.s32.totalorder %s27, 1
      %p155 = scmp.ne.s32.totalorder %s150, %s152
      %p156 = scmp.eq.s32.totalorder %s27, 0
      %p157 = por %p155, %p156
      %p158 = scmp.ne.s32.totalorder %s150, %s152
      %p159 = scmp.eq.s32.totalorder %s32, 1
      %p160 = por %p158, %p159
      %p161 = scmp.ne.s32.totalorder %s152, %s153
      %p162 = scmp.eq.s32.totalorder %s32, 0
      %p163 = por %p161, %p162
      %p164 = scmp.ne.s32.totalorder %s152, %s153
      %p165 = scmp.eq.s32.totalorder %s33, 1
      %p166 = por %p164, %p165
      %p168 = scmp.ne.s32.totalorder %s153, %s167
      %p169 = scmp.eq.s32.totalorder %s33, 0
      %p170 = por %p168, %p169
      %s172 = sadd.s32 %s171, 1
      %p175 = scmp.eq.s32.totalorder %s27, 1
      %p176 = scmp.ne.s32.totalorder %s171, %s173
      %p177 = scmp.eq.s32.totalorder %s27, 0
      %p178 = por %p176, %p177
      %p179 = scmp.ne.s32.totalorder %s171, %s173
      %p180 = scmp.eq.s32.totalorder %s32, 1
      %p181 = por %p179, %p180
      %p182 = scmp.ne.s32.totalorder %s173, %s174
      %p183 = scmp.eq.s32.totalorder %s32, 0
      %p184 = por %p182, %p183
      %p185 = scmp.ne.s32.totalorder %s173, %s174
      %p186 = scmp.eq.s32.totalorder %s33, 1
      %p187 = por %p185, %p186
      %p189 = scmp.ne.s32.totalorder %s174, %s188
      %p190 = scmp.eq.s32.totalorder %s33, 0
      %p191 = por %p189, %p190
      %s193 = sadd.s32 %s192, 1
      %p196 = scmp.eq.s32.totalorder %s27, 1
      %p197 = scmp.ne.s32.totalorder %s192, %s194
      %p198 = scmp.eq.s32.totalorder %s27, 0
      %p199 = por %p197, %p198
      %p200 = scmp.ne.s32.totalorder %s192, %s194
      %p201 = scmp.eq.s32.totalorder %s32, 1
      %p202 = por %p200, %p201
      %p203 = scmp.ne.s32.totalorder %s194, %s195
      %p204 = scmp.eq.s32.totalorder %s32, 0
      %p205 = por %p203, %p204
      %p206 = scmp.ne.s32.totalorder %s194, %s195
      %p207 = scmp.eq.s32.totalorder %s33, 1
      %p208 = por %p206, %p207
      %p210 = scmp.ne.s32.totalorder %s195, %s209
      %p211 = scmp.eq.s32.totalorder %s33, 0
      %p212 = por %p210, %p211
      %s214 = sadd.s32 %s213, 1
      %p217 = scmp.eq.s32.totalorder %s27, 1
      %p218 = scmp.ne.s32.totalorder %s213, %s215
      %p219 = scmp.eq.s32.totalorder %s27, 0
      %p220 = por %p218, %p219
      %p221 = scmp.ne.s32.totalorder %s213, %s215
      %p222 = scmp.eq.s32.totalorder %s32, 1
      %p223 = por %p221, %p222
      %p224 = scmp.ne.s32.totalorder %s215, %s216
      %p225 = scmp.eq.s32.totalorder %s32, 0
      %p226 = por %p224, %p225
      %p227 = scmp.ne.s32.totalorder %s215, %s216
      %p228 = scmp.eq.s32.totalorder %s33, 1
      %p229 = por %p227, %p228
      %p231 = scmp.ne.s32.totalorder %s216, %s230
      %p232 = scmp.eq.s32.totalorder %s33, 0
      %p233 = por %p231, %p232
      %s235 = sadd.s32 %s234, 1
      %p238 = scmp.eq.s32.totalorder %s27, 1
      %p239 = scmp.ne.s32.totalorder %s234, %s236
      %p240 = scmp.eq.s32.totalorder %s27, 0
      %p241 = por %p239, %p240
      %p242 = scmp.ne.s32.totalorder %s234, %s236
      %p243 = scmp.eq.s32.totalorder %s32, 1
      %p244 = por %p242, %p243
      %p245 = scmp.ne.s32.totalorder %s236, %s237
      %p246 = scmp.eq.s32.totalorder %s32, 0
      %p247 = por %p245, %p246
      %p248 = scmp.ne.s32.totalorder %s236, %s237
      %p249 = scmp.eq.s32.totalorder %s33, 1
      %p250 = por %p248, %p249
      %p252 = scmp.ne.s32.totalorder %s237, %s251
      %p253 = scmp.eq.s32.totalorder %s33, 0
      %p254 = por %p252, %p253
      %s256 = sadd.s32 %s255, 1
      %p259 = scmp.eq.s32.totalorder %s27, 1
      %p260 = scmp.ne.s32.totalorder %s255, %s257
      %p261 = scmp.eq.s32.totalorder %s27, 0
      %p262 = por %p260, %p261
      %p263 = scmp.ne.s32.totalorder %s255, %s257
      %p264 = scmp.eq.s32.totalorder %s32, 1
      %p265 = por %p263, %p264
      %p266 = scmp.ne.s32.totalorder %s257, %s258
      %p267 = scmp.eq.s32.totalorder %s32, 0
      %p268 = por %p266, %p267
      %p269 = scmp.ne.s32.totalorder %s257, %s258
      %p270 = scmp.eq.s32.totalorder %s33, 1
      %p271 = por %p269, %p270
      %p273 = scmp.ne.s32.totalorder %s258, %s272
      %p274 = scmp.eq.s32.totalorder %s33, 0
      %p275 = por %p273, %p274
      %s277 = sadd.s32 %s276, 1
      %p280 = scmp.eq.s32.totalorder %s27, 1
      %p281 = scmp.ne.s32.totalorder %s276, %s278
      %p282 = scmp.eq.s32.totalorder %s27, 0
      %p283 = por %p281, %p282
      %p284 = scmp.ne.s32.totalorder %s276, %s278
      %p285 = scmp.eq.s32.totalorder %s32, 1
      %p286 = por %p284, %p285
      %p287 = scmp.ne.s32.totalorder %s278, %s279
      %p288 = scmp.eq.s32.totalorder %s32, 0
      %p289 = por %p287, %p288
      %p290 = scmp.ne.s32.totalorder %s278, %s279
      %p291 = scmp.eq.s32.totalorder %s33, 1
      %p292 = por %p290, %p291
      %p294 = scmp.ne.s32.totalorder %s279, %s293
      %p295 = scmp.eq.s32.totalorder %s33, 0
      %p296 = por %p294, %p295
      %s297 = ssub.s32 %s34, %s46
      %p298 = scmp.eq.s32.totalorder %s297, 0
      %s300 = sadd.s32 %s299, 1
      %s301 = scalar_select %p298, %s299, %s300
      %p304 = pneg %p298
      %p305 = scmp.eq.s32.totalorder %s27, 1
      %p306 = por %p304, %p305
      %p307 = scmp.ne.s32.totalorder %s299, %s302
      %p308 = scmp.eq.s32.totalorder %s27, 0
      %p309 = por %p307, %p308
      %p310 = scmp.ne.s32.totalorder %s299, %s302
      %p311 = scmp.eq.s32.totalorder %s32, 1
      %p312 = por %p310, %p311
      %p313 = scmp.ne.s32.totalorder %s302, %s303
      %p314 = scmp.eq.s32.totalorder %s32, 0
      %p315 = por %p313, %p314
      %p316 = scmp.ne.s32.totalorder %s302, %s303
      %p317 = scmp.eq.s32.totalorder %s33, 1
      %p318 = por %p316, %p317
      %p320 = scmp.ne.s32.totalorder %s303, %s319
      %p321 = scmp.eq.s32.totalorder %s33, 0
      %p322 = por %p320, %p321
      %p323 = scmp.le.s32.totalorder 1, %s27
      %p324 = scmp.lt.s32.totalorder %s27, 3
      %p325 = pnand %p323, %p324
      %p326 = pneg %p325
      // Predicated region
      $region9: #{tpu_custom_call.1} parent=5 // pred_check
        _
      $region10: #{tpu_custom_call.1} parent=5 // pred_check_branch
        %328 = sbr.rel (%p325) target = $region12
      $region11: #{tpu_custom_call.1} parent=5 // pred_region
        %s329 = ssub.s32 %s27, 1
        // Predicated region
        $region13: #{tpu_custom_call.1} parent=11 // pred_check
          %p330 = pneg %p142
        $region14: #{tpu_custom_call.1} parent=11 // pred_check_branch
          %332 = sbr.rel (%p330) target = $region16
        $region15: #{tpu_custom_call.1} parent=11 // pred_region
          _
        $region16: #{tpu_custom_call.1} parent=11 // pred_fallthru
          _
        // Predicated region
        $region17: #{tpu_custom_call.1} parent=11 // pred_check
          %p333 = pneg %p163
        $region18: #{tpu_custom_call.1} parent=11 // pred_check_branch
          %335 = sbr.rel (%p333) target = $region20
        $region19: #{tpu_custom_call.1} parent=11 // pred_region
          _
        $region20: #{tpu_custom_call.1} parent=11 // pred_fallthru
          _
        // Predicated region
        $region21: #{tpu_custom_call.1} parent=11 // pred_check
          %p336 = pneg %p184
        $region22: #{tpu_custom_call.1} parent=11 // pred_check_branch
          %338 = sbr.rel (%p336) target = $region24
        $region23: #{tpu_custom_call.1} parent=11 // pred_region
          _
        $region24: #{tpu_custom_call.1} parent=11 // pred_fallthru
          _
        // Predicated region
        $region25: #{tpu_custom_call.1} parent=11 // pred_check
          %p339 = pneg %p205
        $region26: #{tpu_custom_call.1} parent=11 // pred_check_branch
          %341 = sbr.rel (%p339) target = $region28
        $region27: #{tpu_custom_call.1} parent=11 // pred_region
          %s343 = ssub.s32 512, 512
          %344 = vsyncadd [#allocation11], %s343
          %s345 = sshll.u32 [#allocation10], 4
          %s346 = int_to_ptr.vmem [resolvable:$true] %s345
          %351 = dma.hbm_to_vmem [thread:$0]  %s6, 512, %s346, [#allocation11], 128, 128, 8
        $region28: #{tpu_custom_call.1} parent=11 // pred_fallthru
          _
        // Predicated region
        $region29: #{tpu_custom_call.1} parent=11 // pred_check
          %p352 = pneg %p226
        $region30: #{tpu_custom_call.1} parent=11 // pred_check_branch
          %354 = sbr.rel (%p352) target = $region32
        $region31: #{tpu_custom_call.1} parent=11 // pred_region
          %s356 = ssub.s32 512, 512
          %357 = vsyncadd [#allocation11], %s356
          %s358 = sshll.u32 [#allocation12], 4
          %s359 = int_to_ptr.vmem [resolvable:$true] %s358
          %364 = dma.hbm_to_vmem [thread:$0]  %s7, 512, %s359, [#allocation11], 128, 128, 8
        $region32: #{tpu_custom_call.1} parent=11 // pred_fallthru
          _
        // Predicated region
        $region33: #{tpu_custom_call.1} parent=11 // pred_check
          %p365 = pneg %p247
        $region34: #{tpu_custom_call.1} parent=11 // pred_check_branch
          %367 = sbr.rel (%p365) target = $region36
        $region35: #{tpu_custom_call.1} parent=11 // pred_region
          _
        $region36: #{tpu_custom_call.1} parent=11 // pred_fallthru
          _
        // Predicated region
        $region37: #{tpu_custom_call.1} parent=11 // pred_check
          %p368 = pneg %p268
        $region38: #{tpu_custom_call.1} parent=11 // pred_check_branch
          %370 = sbr.rel (%p368) target = $region40
        $region39: #{tpu_custom_call.1} parent=11 // pred_region
          _
        $region40: #{tpu_custom_call.1} parent=11 // pred_fallthru
          _
        // Predicated region
        $region41: #{tpu_custom_call.1} parent=11 // pred_check
          %p371 = pneg %p289
        $region42: #{tpu_custom_call.1} parent=11 // pred_check_branch
          %373 = sbr.rel (%p371) target = $region44
        $region43: #{tpu_custom_call.1} parent=11 // pred_region
          _
        $region44: #{tpu_custom_call.1} parent=11 // pred_fallthru
          _
      $region12: #{tpu_custom_call.1} parent=5 // pred_fallthru
        _
      %p374 = scmp.lt.s32.totalorder %s27, 2
      // Predicated region
      $region45: #{tpu_custom_call.1} parent=5 // pred_check
        %p375 = pneg %p374
      $region46: #{tpu_custom_call.1} parent=5 // pred_check_branch
        %377 = sbr.rel (%p375) target = $region48
      $region47: #{tpu_custom_call.1} parent=5 // pred_region
        // Predicated region
        $region49: #{tpu_custom_call.1} parent=47 // pred_check
          %p378 = pneg %p61
        $region50: #{tpu_custom_call.1} parent=47 // pred_check_branch
          %380 = sbr.rel (%p378) target = $region52
        $region51: #{tpu_custom_call.1} parent=47 // pred_region
          %s381 = sand.u32 %s51, 1
          %s382 = scalar_lea.sflag [#allocation5], %s381
          %s383 = sand.u32 %s51, 1
          %s384 = smul.addr %s383, 8
          %s385 = scalar_lea.vmem [#allocation4], %s384
          %s387 = ssub.s32 128, 128
          %388 = vsyncadd %s382, %s387
          %s389 = sadd.s32 %s35, %s34
          %s390 = smul.addr %s389, 128
          %s391 = scalar_lea.hbm %s0, %s390
          %s393 = sshll.u32 %s385, 4
          %s394 = int_to_ptr.vmem [resolvable:$true] %s393
          %396 = dma.hbm_to_vmem [thread:$0]  %s391, 128, %s394, %s382
        $region52: #{tpu_custom_call.1} parent=47 // pred_fallthru
          _
        // Predicated region
        $region53: #{tpu_custom_call.1} parent=47 // pred_check
          %p397 = pneg %p87
        $region54: #{tpu_custom_call.1} parent=47 // pred_check_branch
          %399 = sbr.rel (%p397) target = $region56
        $region55: #{tpu_custom_call.1} parent=47 // pred_region
          %s400 = sand.u32 %s27, 1
          %s401 = scalar_lea.sflag [#allocation8], %s400
          %s402 = sand.u32 %s77, 1
          %s403 = smul.addr %s402, 8
          %s404 = scalar_lea.vmem [#allocation7], %s403
          %s406 = ssub.s32 128, 128
          %407 = vsyncadd %s401, %s406
          %s408 = smul.addr %s34, 128
          %s409 = scalar_lea.hbm %s1, %s408
          %s411 = sshll.u32 %s404, 4
          %s412 = int_to_ptr.vmem [resolvable:$true] %s411
          %414 = dma.hbm_to_vmem [thread:$0]  %s409, 128, %s412, %s401
        $region56: #{tpu_custom_call.1} parent=47 // pred_fallthru
          _
        // Predicated region
        $region57: #{tpu_custom_call.1} parent=47 // pred_check
          %p415 = pneg %p115
        $region58: #{tpu_custom_call.1} parent=47 // pred_check_branch
          %417 = sbr.rel (%p415) target = $region60
        $region59: #{tpu_custom_call.1} parent=47 // pred_region
          %s418 = sand.u32 %s27, 1
          %s419 = scalar_lea.sflag [#allocation8], %s418
          %s420 = sand.u32 %s105, 1
          %s421 = smul.addr %s420, 8
          %s422 = scalar_lea.vmem [#allocation9], %s421
          %s424 = ssub.s32 128, 128
          %425 = vsyncadd %s419, %s424
          %s426 = sadd.s32 %s35, %s34
          %s427 = smul.addr %s426, 128
          %s428 = scalar_lea.hbm %s2, %s427
          %s430 = sshll.u32 %s422, 4
          %s431 = int_to_ptr.vmem [resolvable:$true] %s430
          %433 = dma.hbm_to_vmem [thread:$0]  %s428, 128, %s431, %s419
        $region60: #{tpu_custom_call.1} parent=47 // pred_fallthru
          _
      $region48: #{tpu_custom_call.1} parent=5 // pred_fallthru
        _
      %p434 = scmp.le.s32.totalorder 1, %s27
      %p435 = scmp.lt.s32.totalorder %s27, 3
      %p436 = pnand %p434, %p435
      %p437 = pneg %p436
      // Predicated region
      $region61: #{tpu_custom_call.1} parent=5 // pred_check
        _
      $region62: #{tpu_custom_call.1} parent=5 // pred_check_branch
        %439 = sbr.rel (%p436) target = $region64
      $region63: #{tpu_custom_call.1} parent=5 // pred_region
        %s440 = ssub.s32 %s27, 1
        %s441 = sand.u32 %s54, 1
        %s442 = scalar_lea.sflag [#allocation5], %s441
        %s443 = sand.u32 %s54, 1
        %s444 = smul.addr %s443, 8
        %s445 = scalar_lea.vmem [#allocation4], %s444
        // Predicated region
        $region65: #{tpu_custom_call.1} parent=63 // pred_check
          %p446 = pneg %p67
        $region66: #{tpu_custom_call.1} parent=63 // pred_check_branch
          %448 = sbr.rel (%p446) target = $region68
        $region67: #{tpu_custom_call.1} parent=63 // pred_region
          %449 = dma.done %s442, 128
        $region68: #{tpu_custom_call.1} parent=63 // pred_fallthru
          _
        %s450 = sand.u32 %s32, 1
        %s451 = scalar_lea.sflag [#allocation8], %s450
        %s452 = sand.u32 %s80, 1
        %s453 = smul.addr %s452, 8
        %s454 = scalar_lea.vmem [#allocation7], %s453
        // Predicated region
        $region69: #{tpu_custom_call.1} parent=63 // pred_check
          %p455 = pneg %p93
        $region70: #{tpu_custom_call.1} parent=63 // pred_check_branch
          %457 = sbr.rel (%p455) target = $region72
        $region71: #{tpu_custom_call.1} parent=63 // pred_region
          %458 = dma.done %s451, 128
        $region72: #{tpu_custom_call.1} parent=63 // pred_fallthru
          _
        %s459 = sand.u32 %s32, 1
        %s460 = scalar_lea.sflag [#allocation8], %s459
        %s461 = sand.u32 %s108, 1
        %s462 = smul.addr %s461, 8
        %s463 = scalar_lea.vmem [#allocation9], %s462
        // Predicated region
        $region73: #{tpu_custom_call.1} parent=63 // pred_check
          %p464 = pneg %p121
        $region74: #{tpu_custom_call.1} parent=63 // pred_check_branch
          %466 = sbr.rel (%p464) target = $region76
        $region75: #{tpu_custom_call.1} parent=63 // pred_region
          %467 = dma.done %s460, 128
        $region76: #{tpu_custom_call.1} parent=63 // pred_fallthru
          _
        // Predicated region
        $region77: #{tpu_custom_call.1} parent=63 // pred_check
          %p468 = pneg %p205
        $region78: #{tpu_custom_call.1} parent=63 // pred_check_branch
          %470 = sbr.rel (%p468) target = $region80
        $region79: #{tpu_custom_call.1} parent=63 // pred_region
          %471 = dma.done [#allocation11], 512
        $region80: #{tpu_custom_call.1} parent=63 // pred_fallthru
          _
        // Predicated region
        $region81: #{tpu_custom_call.1} parent=63 // pred_check
          %p472 = pneg %p226
        $region82: #{tpu_custom_call.1} parent=63 // pred_check_branch
          %474 = sbr.rel (%p472) target = $region84
        $region83: #{tpu_custom_call.1} parent=63 // pred_region
          %475 = dma.done [#allocation11], 512
        $region84: #{tpu_custom_call.1} parent=63 // pred_fallthru
          _
        %s476 = sand.u32 %s54, 1
        %s477 = scalar_lea.sflag [#allocation5], %s476
        %s478 = sand.u32 %s54, 1
        %s479 = smul.addr %s478, 8
        %s480 = scalar_lea.vmem [#allocation4], %s479
        %p481 = pneg %p67
        %p482 = pneg %p64
        %s483 = sand.u32 %s32, 1
        %s484 = scalar_lea.sflag [#allocation8], %s483
        %s485 = sand.u32 %s80, 1
        %s486 = smul.addr %s485, 8
        %s487 = scalar_lea.vmem [#allocation7], %s486
        %p488 = pneg %p93
        %p489 = pneg %p90
        %s490 = sand.u32 %s32, 1
        %s491 = scalar_lea.sflag [#allocation8], %s490
        %s492 = sand.u32 %s108, 1
        %s493 = smul.addr %s492, 8
        %s494 = scalar_lea.vmem [#allocation9], %s493
        %p495 = pneg %p121
        %p496 = pneg %p118
        %p497 = pneg %p142
        %p498 = pneg %p139
        %p499 = pneg %p163
        %p500 = pneg %p160
        %p501 = pneg %p184
        %p502 = pneg %p181
        %p503 = pneg %p205
        %p504 = pneg %p202
        %p505 = pneg %p226
        %p506 = pneg %p223
        %p507 = pneg %p247
        %p508 = pneg %p244
        %p509 = pneg %p268
        %p510 = pneg %p265
        %p511 = pneg %p289
        %p512 = pneg %p286
        %p513 = pneg %p315
        %p514 = pneg %p312
        %s515 = sand.u32 %s302, 1
        %s516 = scalar_lea.sflag [#allocation6], %s515
        %s517 = sand.u32 %s302, 1
        %s518 = smul.addr %s517, 8
        %s519 = scalar_lea.vmem [#allocation13], %s518
        %p520 = scmp.eq.s32.totalorder %s37, 0
        // Predicated region
        $region85: #{tpu_custom_call.1} parent=63 // pred_check
          %p521 = pneg %p520
        $region86: #{tpu_custom_call.1} parent=63 // pred_check_branch
          %523 = sbr.rel (%p521) target = $region88
        $region87: #{tpu_custom_call.1} parent=63 // pred_region
          %v524 = vld [vmem:[%s454] sm:$0xff]
          %v525 = vld [vmem:[%s3] sm:$0xff]
          %v526 = vld [vmem:[%s3 + $0x8] sm:$0xff]
          %v527 = vld [vmem:[%s3 + $0x10] sm:$0xff]
          %v528 = vld [vmem:[%s3 + $0x18] sm:$0xff]
          %vm529 = vcmask 261120
          %v531 = vsel %vm529, %v524, 0
          %533 = vmatprep.subr.mxu0 0.0
          %534 = vmatpush1.msra.mxu0 0.0
          %535 = vmatprep.subr.mxu0 0.0
          %536 = vmatpush1.msra.mxu0 0.0
          %537 = vmatprep.subr.mxu0 0.0
          %538 = vmatpush1.msra.mxu0 0.0
          %539 = vmatprep.subr.mxu0 0.0
          %540 = vmatpush1.msra.mxu0 0.0
          %541 = vmatprep.subr.mxu0 0.0
          %542 = vmatpush1.msra.mxu0 0.0
          %543 = vmatprep.subr.mxu0 0.0
          %544 = vmatpush1.msra.mxu0 0.0
          %545 = vmatprep.subr.mxu0 0.0
          %546 = vmatpush1.msra.mxu0 0.0
          %547 = vmatprep.subr.mxu0 0.0
          %548 = vmatpush1.msra.mxu0 0.0
          %549 = vmatprep.subr.mxu0 0.0
          %550 = vmatpush1.msra.mxu0 0.0
          %551 = vmatprep.subr.mxu0 0.0
          %552 = vmatpush1.msra.mxu0 0.0
          %553 = vmatprep.subr.mxu0 0.0
          %554 = vmatpush1.msra.mxu0 0.0
          %555 = vmatprep.subr.mxu0 0.0
          %556 = vmatpush1.msra.mxu0 0.0
          %557 = vmatprep.subr.mxu0 0.0
          %558 = vmatpush1.msra.mxu0 %v528
          %559 = vmatprep.subr.mxu0 0.0
          %560 = vmatpush1.msra.mxu0 %v527
          %561 = vmatprep.subr.mxu0 0.0
          %562 = vmatpush1.msra.mxu0 %v526
          %563 = vmatprep.subr.mxu0 0.0
          %564 = vmatpush1.msra.mxu0 %v525
          %565 = vmatprep.subr.mxu0 0.0
          %566 = vmatpush2.msra.mxu0 0.0
          %567 = vmatprep.subr.mxu0 0.0
          %568 = vmatpush2.msra.mxu0 0.0
          %569 = vmatprep.subr.mxu0 0.0
          %570 = vmatpush2.msra.mxu0 0.0
          %571 = vmatprep.subr.mxu0 0.0
          %572 = vmatpush2.msra.mxu0 0.0
          %573 = vmatprep.subr.mxu0 0.0
          %574 = vmatpush2.msra.mxu0 0.0
          %575 = vmatprep.subr.mxu0 0.0
          %576 = vmatpush2.msra.mxu0 0.0
          %577 = vmatprep.subr.mxu0 0.0
          %578 = vmatpush2.msra.mxu0 0.0
          %579 = vmatprep.subr.mxu0 0.0
          %580 = vmatpush2.msra.mxu0 0.0
          %581 = vmatprep.subr.mxu0 0.0
          %582 = vmatpush2.msra.mxu0 0.0
          %583 = vmatprep.subr.mxu0 0.0
          %584 = vmatpush2.msra.mxu0 0.0
          %585 = vmatprep.subr.mxu0 0.0
          %586 = vmatpush2.msra.mxu0 0.0
          %587 = vmatprep.subr.mxu0 0.0
          %588 = vmatpush2.msra.mxu0 0.0
          %589 = vmatprep.subr.mxu0 0.0
          %590 = vmatpush2.msra.mxu0 0.0
          %591 = vmatprep.subr.mxu0 0.0
          %592 = vmatpush2.msra.mxu0 0.0
          %593 = vmatprep.subr.mxu0 0.0
          %594 = vmatpush2.msra.mxu0 0.0
          %595 = vmatprep.subr.mxu0 0.0
          %596 = vmatpush2.msra.mxu0 0.0
          %597 = vmatprep.mubr.f32.mxu0 0.0
          %598 = vmatmul.mubr.f32.gmra.mxu0 %v531
          %v599 = vpop.f32.mrf.mxu0
          %v600 = vadd.f32 0.0, %v599
          %v601 = vpop.f32.mrf.mxu0
          %602 = vdwg.mxu0
          %603 = vst.msk [vmem:[#allocation2] sm:$0xff] %vm529, %v600
          %604 = vst.msk [vmem:[#allocation3] sm:$0xff] %vm529, 0.0
        $region88: #{tpu_custom_call.1} parent=63 // pred_fallthru
          _
        %v605 = vld [vmem:[%s445] sm:$0xff]
        %v606 = vld [vmem:[%s4] sm:$0xff]
        %v607 = vld [vmem:[%s4 + $0x8] sm:$0xff]
        %v608 = vld [vmem:[%s4 + $0x10] sm:$0xff]
        %v609 = vld [vmem:[%s4 + $0x18] sm:$0xff]
        %vm610 = vcmask 261120
        %v612 = vsel %vm610, %v605, 0
        %614 = vmatprep.subr.mxu0 0.0
        %615 = vmatpush1.msra.mxu0 0.0
        %616 = vmatprep.subr.mxu0 0.0
        %617 = vmatpush1.msra.mxu0 0.0
        %618 = vmatprep.subr.mxu0 0.0
        %619 = vmatpush1.msra.mxu0 0.0
        %620 = vmatprep.subr.mxu0 0.0
        %621 = vmatpush1.msra.mxu0 0.0
        %622 = vmatprep.subr.mxu0 0.0
        %623 = vmatpush1.msra.mxu0 0.0
        %624 = vmatprep.subr.mxu0 0.0
        %625 = vmatpush1.msra.mxu0 0.0
        %626 = vmatprep.subr.mxu0 0.0
        %627 = vmatpush1.msra.mxu0 0.0
        %628 = vmatprep.subr.mxu0 0.0
        %629 = vmatpush1.msra.mxu0 0.0
        %630 = vmatprep.subr.mxu0 0.0
        %631 = vmatpush1.msra.mxu0 0.0
        %632 = vmatprep.subr.mxu0 0.0
        %633 = vmatpush1.msra.mxu0 0.0
        %634 = vmatprep.subr.mxu0 0.0
        %635 = vmatpush1.msra.mxu0 0.0
        %636 = vmatprep.subr.mxu0 0.0
        %637 = vmatpush1.msra.mxu0 0.0
        %638 = vmatprep.subr.mxu0 0.0
        %639 = vmatpush1.msra.mxu0 %v609
        %640 = vmatprep.subr.mxu0 0.0
        %641 = vmatpush1.msra.mxu0 %v608
        %642 = vmatprep.subr.mxu0 0.0
        %643 = vmatpush1.msra.mxu0 %v607
        %644 = vmatprep.subr.mxu0 0.0
        %645 = vmatpush1.msra.mxu0 %v606
        %646 = vmatprep.subr.mxu0 0.0
        %647 = vmatpush2.msra.mxu0 0.0
        %648 = vmatprep.subr.mxu0 0.0
        %649 = vmatpush2.msra.mxu0 0.0
        %650 = vmatprep.subr.mxu0 0.0
        %651 = vmatpush2.msra.mxu0 0.0
        %652 = vmatprep.subr.mxu0 0.0
        %653 = vmatpush2.msra.mxu0 0.0
        %654 = vmatprep.subr.mxu0 0.0
        %655 = vmatpush2.msra.mxu0 0.0
        %656 = vmatprep.subr.mxu0 0.0
        %657 = vmatpush2.msra.mxu0 0.0
        %658 = vmatprep.subr.mxu0 0.0
        %659 = vmatpush2.msra.mxu0 0.0
        %660 = vmatprep.subr.mxu0 0.0
        %661 = vmatpush2.msra.mxu0 0.0
        %662 = vmatprep.subr.mxu0 0.0
        %663 = vmatpush2.msra.mxu0 0.0
        %664 = vmatprep.subr.mxu0 0.0
        %665 = vmatpush2.msra.mxu0 0.0
        %666 = vmatprep.subr.mxu0 0.0
        %667 = vmatpush2.msra.mxu0 0.0
        %668 = vmatprep.subr.mxu0 0.0
        %669 = vmatpush2.msra.mxu0 0.0
        %670 = vmatprep.subr.mxu0 0.0
        %671 = vmatpush2.msra.mxu0 0.0
        %672 = vmatprep.subr.mxu0 0.0
        %673 = vmatpush2.msra.mxu0 0.0
        %674 = vmatprep.subr.mxu0 0.0
        %675 = vmatpush2.msra.mxu0 0.0
        %676 = vmatprep.subr.mxu0 0.0
        %677 = vmatpush2.msra.mxu0 0.0
        %678 = vmatprep.mubr.f32.mxu0 0.0
        %679 = vmatmul.mubr.f32.gmra.mxu0 %v612
        %v680 = vpop.f32.mrf.mxu0
        %v681 = vadd.f32 0.0, %v680
        %v682 = vpop.f32.mrf.mxu0
        %683 = vdwg.mxu0
        %v684 = vld [vmem:[%s463] sm:$0xff]
        %v685 = vld [vmem:[%s5] sm:$0xff]
        %v686 = vld [vmem:[%s5 + $0x8] sm:$0xff]
        %v687 = vld [vmem:[%s5 + $0x10] sm:$0xff]
        %v688 = vld [vmem:[%s5 + $0x18] sm:$0xff]
        %v690 = vsel %vm610, %v684, 0
        %692 = vmatprep.subr.mxu0 0.0
        %693 = vmatpush1.msra.mxu0 0.0
        %694 = vmatprep.subr.mxu0 0.0
        %695 = vmatpush1.msra.mxu0 0.0
        %696 = vmatprep.subr.mxu0 0.0
        %697 = vmatpush1.msra.mxu0 0.0
        %698 = vmatprep.subr.mxu0 0.0
        %699 = vmatpush1.msra.mxu0 0.0
        %700 = vmatprep.subr.mxu0 0.0
        %701 = vmatpush1.msra.mxu0 0.0
        %702 = vmatprep.subr.mxu0 0.0
        %703 = vmatpush1.msra.mxu0 0.0
        %704 = vmatprep.subr.mxu0 0.0
        %705 = vmatpush1.msra.mxu0 0.0
        %706 = vmatprep.subr.mxu0 0.0
        %707 = vmatpush1.msra.mxu0 0.0
        %708 = vmatprep.subr.mxu0 0.0
        %709 = vmatpush1.msra.mxu0 0.0
        %710 = vmatprep.subr.mxu0 0.0
        %711 = vmatpush1.msra.mxu0 0.0
        %712 = vmatprep.subr.mxu0 0.0
        %713 = vmatpush1.msra.mxu0 0.0
        %714 = vmatprep.subr.mxu0 0.0
        %715 = vmatpush1.msra.mxu0 0.0
        %716 = vmatprep.subr.mxu0 0.0
        %717 = vmatpush1.msra.mxu0 %v688
        %718 = vmatprep.subr.mxu0 0.0
        %719 = vmatpush1.msra.mxu0 %v687
        %720 = vmatprep.subr.mxu0 0.0
        %721 = vmatpush1.msra.mxu0 %v686
        %722 = vmatprep.subr.mxu0 0.0
        %723 = vmatpush1.msra.mxu0 %v685
        %724 = vmatprep.subr.mxu0 0.0
        %725 = vmatpush2.msra.mxu0 0.0
        %726 = vmatprep.subr.mxu0 0.0
        %727 = vmatpush2.msra.mxu0 0.0
        %728 = vmatprep.subr.mxu0 0.0
        %729 = vmatpush2.msra.mxu0 0.0
        %730 = vmatprep.subr.mxu0 0.0
        %731 = vmatpush2.msra.mxu0 0.0
        %732 = vmatprep.subr.mxu0 0.0
        %733 = vmatpush2.msra.mxu0 0.0
        %734 = vmatprep.subr.mxu0 0.0
        %735 = vmatpush2.msra.mxu0 0.0
        %736 = vmatprep.subr.mxu0 0.0
        %737 = vmatpush2.msra.mxu0 0.0
        %738 = vmatprep.subr.mxu0 0.0
        %739 = vmatpush2.msra.mxu0 0.0
        %740 = vmatprep.subr.mxu0 0.0
        %741 = vmatpush2.msra.mxu0 0.0
        %742 = vmatprep.subr.mxu0 0.0
        %743 = vmatpush2.msra.mxu0 0.0
        %744 = vmatprep.subr.mxu0 0.0
        %745 = vmatpush2.msra.mxu0 0.0
        %746 = vmatprep.subr.mxu0 0.0
        %747 = vmatpush2.msra.mxu0 0.0
        %748 = vmatprep.subr.mxu0 0.0
        %749 = vmatpush2.msra.mxu0 0.0
        %750 = vmatprep.subr.mxu0 0.0
        %751 = vmatpush2.msra.mxu0 0.0
        %752 = vmatprep.subr.mxu0 0.0
        %753 = vmatpush2.msra.mxu0 0.0
        %754 = vmatprep.subr.mxu0 0.0
        %755 = vmatpush2.msra.mxu0 0.0
        %756 = vmatprep.mubr.f32.mxu0 0.0
        %757 = vmatmul.mubr.f32.gmra.mxu0 %v690
        %v758 = vpop.f32.mrf.mxu0
        %v759 = vadd.f32 0.0, %v758
        %v760 = vpop.f32.mrf.mxu0
        %761 = vdwg.mxu0
        %v762 = vld [vmem:[#allocation2] sm:$0xff]
        %vm763 = vcmask 130048
        %v765 = vsel %vm763, %v762, 0
        %v768 = vsel %vm763, %v681, 0
        %770 = vmatprep.subr.mxu0 0.0
        %771 = vmatpush1.xpose.msra.mxu0 0.0
        %772 = vmatprep.subr.mxu0 0.0
        %773 = vmatpush1.xpose.msra.mxu0 0.0
        %774 = vmatprep.subr.mxu0 0.0
        %775 = vmatpush1.xpose.msra.mxu0 0.0
        %776 = vmatprep.subr.mxu0 0.0
        %777 = vmatpush1.xpose.msra.mxu0 0.0
        %778 = vmatprep.subr.mxu0 0.0
        %779 = vmatpush1.xpose.msra.mxu0 0.0
        %780 = vmatprep.subr.mxu0 0.0
        %781 = vmatpush1.xpose.msra.mxu0 0.0
        %782 = vmatprep.subr.mxu0 0.0
        %783 = vmatpush1.xpose.msra.mxu0 0.0
        %784 = vmatprep.subr.mxu0 0.0
        %785 = vmatpush1.xpose.msra.mxu0 0.0
        %786 = vmatprep.subr.mxu0 0.0
        %787 = vmatpush1.xpose.msra.mxu0 0.0
        %788 = vmatprep.subr.mxu0 0.0
        %789 = vmatpush1.xpose.msra.mxu0 0.0
        %790 = vmatprep.subr.mxu0 0.0
        %791 = vmatpush1.xpose.msra.mxu0 0.0
        %792 = vmatprep.subr.mxu0 0.0
        %793 = vmatpush1.xpose.msra.mxu0 0.0
        %794 = vmatprep.subr.mxu0 0.0
        %795 = vmatpush1.xpose.msra.mxu0 0.0
        %796 = vmatprep.subr.mxu0 0.0
        %797 = vmatpush1.xpose.msra.mxu0 0.0
        %798 = vmatprep.subr.mxu0 0.0
        %799 = vmatpush1.xpose.msra.mxu0 0.0
        %800 = vmatprep.subr.mxu0 0.0
        %801 = vmatpush1.xpose.msra.mxu0 %v768
        %802 = vmatprep.subr.mxu0 0.0
        %803 = vmatpush2.xpose.msra.mxu0 0.0
        %804 = vmatprep.subr.mxu0 0.0
        %805 = vmatpush2.xpose.msra.mxu0 0.0
        %806 = vmatprep.subr.mxu0 0.0
        %807 = vmatpush2.xpose.msra.mxu0 0.0
        %808 = vmatprep.subr.mxu0 0.0
        %809 = vmatpush2.xpose.msra.mxu0 0.0
        %810 = vmatprep.subr.mxu0 0.0
        %811 = vmatpush2.xpose.msra.mxu0 0.0
        %812 = vmatprep.subr.mxu0 0.0
        %813 = vmatpush2.xpose.msra.mxu0 0.0
        %814 = vmatprep.subr.mxu0 0.0
        %815 = vmatpush2.xpose.msra.mxu0 0.0
        %816 = vmatprep.subr.mxu0 0.0
        %817 = vmatpush2.xpose.msra.mxu0 0.0
        %818 = vmatprep.subr.mxu0 0.0
        %819 = vmatpush2.xpose.msra.mxu0 0.0
        %820 = vmatprep.subr.mxu0 0.0
        %821 = vmatpush2.xpose.msra.mxu0 0.0
        %822 = vmatprep.subr.mxu0 0.0
        %823 = vmatpush2.xpose.msra.mxu0 0.0
        %824 = vmatprep.subr.mxu0 0.0
        %825 = vmatpush2.xpose.msra.mxu0 0.0
        %826 = vmatprep.subr.mxu0 0.0
        %827 = vmatpush2.xpose.msra.mxu0 0.0
        %828 = vmatprep.subr.mxu0 0.0
        %829 = vmatpush2.xpose.msra.mxu0 0.0
        %830 = vmatprep.subr.mxu0 0.0
        %831 = vmatpush2.xpose.msra.mxu0 0.0
        %832 = vmatprep.subr.mxu0 0.0
        %833 = vmatpush2.xpose.msra.mxu0 0.0
        %834 = vmatprep.mubr.f32.mxu0 0.0
        %835 = vmatmul.mubr.f32.gmra.mxu0 %v765
        %v836 = vpop.f32.mrf.mxu0
        %v837 = vadd.f32 0.0, %v836
        %v838 = vpop.f32.mrf.mxu0
        %839 = vdwg.mxu0
        %v840 = vmul.f32 %v837, 0.25
        %vm841 = vcmask 64512
        %v842 = vsel %vm841, %v840, -inf
        %v843 = vrot.slane %v842, 4
        %v844 = vmax.f32 %v842, %v843
        %v845 = vrot.slane %v844, 2
        %v846 = vmax.f32 %v844, %v845
        %v847 = vrot.slane %v846, 1
        %v848 = vmax.f32 %v846, %v847
        %v849 = vsub.f32 %v840, %v848
        %v850 = vmul.f32 %v849, 1.442695
        %v851 = vpow.pop %v850
        %v852 = vsel %vm841, %v851, 0.0
        %v853 = vrot.slane %v852, 4
        %v854 = vadd.f32 %v852, %v853
        %v855 = vrot.slane %v854, 2
        %v856 = vadd.f32 %v854, %v855
        %v857 = vrot.slane %v856, 1
        %v858 = vadd.f32 %v856, %v857
        %v859 = vrcp.pop %v858
        %v860 = vmul.f32 %v851, %v859
        %v861 = vld [vmem:[#allocation3] sm:$0xff]
        %v863 = vsel %vm841, %v860, 0
        %865 = vmatprep.subr.mxu0 0.0
        %866 = vmatpush1.msra.mxu0 0.0
        %867 = vmatprep.subr.mxu0 0.0
        %868 = vmatpush1.msra.mxu0 0.0
        %869 = vmatprep.subr.mxu0 0.0
        %870 = vmatpush1.msra.mxu0 0.0
        %871 = vmatprep.subr.mxu0 0.0
        %872 = vmatpush1.msra.mxu0 0.0
        %873 = vmatprep.subr.mxu0 0.0
        %874 = vmatpush1.msra.mxu0 0.0
        %875 = vmatprep.subr.mxu0 0.0
        %876 = vmatpush1.msra.mxu0 0.0
        %877 = vmatprep.subr.mxu0 0.0
        %878 = vmatpush1.msra.mxu0 0.0
        %879 = vmatprep.subr.mxu0 0.0
        %880 = vmatpush1.msra.mxu0 0.0
        %881 = vmatprep.subr.mxu0 0.0
        %882 = vmatpush1.msra.mxu0 0.0
        %883 = vmatprep.subr.mxu0 0.0
        %884 = vmatpush1.msra.mxu0 0.0
        %885 = vmatprep.subr.mxu0 0.0
        %886 = vmatpush1.msra.mxu0 0.0
        %887 = vmatprep.subr.mxu0 0.0
        %888 = vmatpush1.msra.mxu0 0.0
        %889 = vmatprep.subr.mxu0 0.0
        %890 = vmatpush1.msra.mxu0 0.0
        %891 = vmatprep.subr.mxu0 0.0
        %892 = vmatpush1.msra.mxu0 0.0
        %893 = vmatprep.subr.mxu0 0.0
        %894 = vmatpush1.msra.mxu0 0.0
        %895 = vmatprep.subr.mxu0 0.0
        %896 = vmatpush1.msra.mxu0 %v759
        %897 = vmatprep.subr.mxu0 0.0
        %898 = vmatpush2.msra.mxu0 0.0
        %899 = vmatprep.subr.mxu0 0.0
        %900 = vmatpush2.msra.mxu0 0.0
        %901 = vmatprep.subr.mxu0 0.0
        %902 = vmatpush2.msra.mxu0 0.0
        %903 = vmatprep.subr.mxu0 0.0
        %904 = vmatpush2.msra.mxu0 0.0
        %905 = vmatprep.subr.mxu0 0.0
        %906 = vmatpush2.msra.mxu0 0.0
        %907 = vmatprep.subr.mxu0 0.0
        %908 = vmatpush2.msra.mxu0 0.0
        %909 = vmatprep.subr.mxu0 0.0
        %910 = vmatpush2.msra.mxu0 0.0
        %911 = vmatprep.subr.mxu0 0.0
        %912 = vmatpush2.msra.mxu0 0.0
        %913 = vmatprep.subr.mxu0 0.0
        %914 = vmatpush2.msra.mxu0 0.0
        %915 = vmatprep.subr.mxu0 0.0
        %916 = vmatpush2.msra.mxu0 0.0
        %917 = vmatprep.subr.mxu0 0.0
        %918 = vmatpush2.msra.mxu0 0.0
        %919 = vmatprep.subr.mxu0 0.0
        %920 = vmatpush2.msra.mxu0 0.0
        %921 = vmatprep.subr.mxu0 0.0
        %922 = vmatpush2.msra.mxu0 0.0
        %923 = vmatprep.subr.mxu0 0.0
        %924 = vmatpush2.msra.mxu0 0.0
        %925 = vmatprep.subr.mxu0 0.0
        %926 = vmatpush2.msra.mxu0 0.0
        %927 = vmatprep.subr.mxu0 0.0
        %928 = vmatpush2.msra.mxu0 0.0
        %929 = vmatprep.mubr.f32.mxu0 0.0
        %930 = vmatmul.mubr.f32.gmra.mxu0 %v863
        %v931 = vpop.f32.mrf.mxu0
        %v932 = vadd.f32 0.0, %v931
        %v933 = vpop.f32.mrf.mxu0
        %934 = vdwg.mxu0
        %v935 = vadd.f32 %v861, %v932
        %936 = vst.msk [vmem:[#allocation3] sm:$0xff] %vm763, %v935
        %v937 = vld [vmem:[#allocation2] sm:$0xff]
        %939 = vrot.lane.b32.xlu0 %v937, 112
        %v940 = vpop.permute.xlu0 %939
        %941 = vrot.lane.b32.xlu0 %v681, 112
        %v942 = vpop.permute.xlu0 %941
        %v943 = vsel %vm763, %v940, 0
        %v945 = vsel %vm763, %v942, 0
        %947 = vmatprep.subr.mxu0 0.0
        %948 = vmatpush1.xpose.msra.mxu0 0.0
        %949 = vmatprep.subr.mxu0 0.0
        %950 = vmatpush1.xpose.msra.mxu0 0.0
        %951 = vmatprep.subr.mxu0 0.0
        %952 = vmatpush1.xpose.msra.mxu0 0.0
        %953 = vmatprep.subr.mxu0 0.0
        %954 = vmatpush1.xpose.msra.mxu0 0.0
        %955 = vmatprep.subr.mxu0 0.0
        %956 = vmatpush1.xpose.msra.mxu0 0.0
        %957 = vmatprep.subr.mxu0 0.0
        %958 = vmatpush1.xpose.msra.mxu0 0.0
        %959 = vmatprep.subr.mxu0 0.0
        %960 = vmatpush1.xpose.msra.mxu0 0.0
        %961 = vmatprep.subr.mxu0 0.0
        %962 = vmatpush1.xpose.msra.mxu0 0.0
        %963 = vmatprep.subr.mxu0 0.0
        %964 = vmatpush1.xpose.msra.mxu0 0.0
        %965 = vmatprep.subr.mxu0 0.0
        %966 = vmatpush1.xpose.msra.mxu0 0.0
        %967 = vmatprep.subr.mxu0 0.0
        %968 = vmatpush1.xpose.msra.mxu0 0.0
        %969 = vmatprep.subr.mxu0 0.0
        %970 = vmatpush1.xpose.msra.mxu0 0.0
        %971 = vmatprep.subr.mxu0 0.0
        %972 = vmatpush1.xpose.msra.mxu0 0.0
        %973 = vmatprep.subr.mxu0 0.0
        %974 = vmatpush1.xpose.msra.mxu0 0.0
        %975 = vmatprep.subr.mxu0 0.0
        %976 = vmatpush1.xpose.msra.mxu0 0.0
        %977 = vmatprep.subr.mxu0 0.0
        %978 = vmatpush1.xpose.msra.mxu0 %v945
        %979 = vmatprep.subr.mxu0 0.0
        %980 = vmatpush2.xpose.msra.mxu0 0.0
        %981 = vmatprep.subr.mxu0 0.0
        %982 = vmatpush2.xpose.msra.mxu0 0.0
        %983 = vmatprep.subr.mxu0 0.0
        %984 = vmatpush2.xpose.msra.mxu0 0.0
        %985 = vmatprep.subr.mxu0 0.0
        %986 = vmatpush2.xpose.msra.mxu0 0.0
        %987 = vmatprep.subr.mxu0 0.0
        %988 = vmatpush2.xpose.msra.mxu0 0.0
        %989 = vmatprep.subr.mxu0 0.0
        %990 = vmatpush2.xpose.msra.mxu0 0.0
        %991 = vmatprep.subr.mxu0 0.0
        %992 = vmatpush2.xpose.msra.mxu0 0.0
        %993 = vmatprep.subr.mxu0 0.0
        %994 = vmatpush2.xpose.msra.mxu0 0.0
        %995 = vmatprep.subr.mxu0 0.0
        %996 = vmatpush2.xpose.msra.mxu0 0.0
        %997 = vmatprep.subr.mxu0 0.0
        %998 = vmatpush2.xpose.msra.mxu0 0.0
        %999 = vmatprep.subr.mxu0 0.0
        %1000 = vmatpush2.xpose.msra.mxu0 0.0
        %1001 = vmatprep.subr.mxu0 0.0
        %1002 = vmatpush2.xpose.msra.mxu0 0.0
        %1003 = vmatprep.subr.mxu0 0.0
        %1004 = vmatpush2.xpose.msra.mxu0 0.0
        %1005 = vmatprep.subr.mxu0 0.0
        %1006 = vmatpush2.xpose.msra.mxu0 0.0
        %1007 = vmatprep.subr.mxu0 0.0
        %1008 = vmatpush2.xpose.msra.mxu0 0.0
        %1009 = vmatprep.subr.mxu0 0.0
        %1010 = vmatpush2.xpose.msra.mxu0 0.0
        %1011 = vmatprep.mubr.f32.mxu0 0.0
        %1012 = vmatmul.mubr.f32.gmra.mxu0 %v943
        %v1013 = vpop.f32.mrf.mxu0
        %v1014 = vadd.f32 0.0, %v1013
        %v1015 = vpop.f32.mrf.mxu0
        %1016 = vdwg.mxu0
        %v1017 = vmul.f32 %v1014, 0.25
        %v1018 = vsel %vm841, %v1017, -inf
        %v1019 = vrot.slane %v1018, 4
        %v1020 = vmax.f32 %v1018, %v1019
        %v1021 = vrot.slane %v1020, 2
        %v1022 = vmax.f32 %v1020, %v1021
        %v1023 = vrot.slane %v1022, 1
        %v1024 = vmax.f32 %v1022, %v1023
        %v1025 = vsub.f32 %v1017, %v1024
        %v1026 = vmul.f32 %v1025, 1.442695
        %v1027 = vpow.pop %v1026
        %v1028 = vsel %vm841, %v1027, 0.0
        %v1029 = vrot.slane %v1028, 4
        %v1030 = vadd.f32 %v1028, %v1029
        %v1031 = vrot.slane %v1030, 2
        %v1032 = vadd.f32 %v1030, %v1031
        %v1033 = vrot.slane %v1032, 1
        %v1034 = vadd.f32 %v1032, %v1033
        %v1035 = vrcp.pop %v1034
        %v1036 = vmul.f32 %v1027, %v1035
        %v1037 = vld [vmem:[#allocation3] sm:$0xff]
        %1039 = vrot.lane.b32.xlu0 %v759, 112
        %v1040 = vpop.permute.xlu0 %1039
        %v1043 = vsel %vm841, %v1036, 0
        %1045 = vmatprep.subr.mxu0 0.0
        %1046 = vmatpush1.msra.mxu0 0.0
        %1047 = vmatprep.subr.mxu0 0.0
        %1048 = vmatpush1.msra.mxu0 0.0
        %1049 = vmatprep.subr.mxu0 0.0
        %1050 = vmatpush1.msra.mxu0 0.0
        %1051 = vmatprep.subr.mxu0 0.0
        %1052 = vmatpush1.msra.mxu0 0.0
        %1053 = vmatprep.subr.mxu0 0.0
        %1054 = vmatpush1.msra.mxu0 0.0
        %1055 = vmatprep.subr.mxu0 0.0
        %1056 = vmatpush1.msra.mxu0 0.0
        %1057 = vmatprep.subr.mxu0 0.0
        %1058 = vmatpush1.msra.mxu0 0.0
        %1059 = vmatprep.subr.mxu0 0.0
        %1060 = vmatpush1.msra.mxu0 0.0
        %1061 = vmatprep.subr.mxu0 0.0
        %1062 = vmatpush1.msra.mxu0 0.0
        %1063 = vmatprep.subr.mxu0 0.0
        %1064 = vmatpush1.msra.mxu0 0.0
        %1065 = vmatprep.subr.mxu0 0.0
        %1066 = vmatpush1.msra.mxu0 0.0
        %1067 = vmatprep.subr.mxu0 0.0
        %1068 = vmatpush1.msra.mxu0 0.0
        %1069 = vmatprep.subr.mxu0 0.0
        %1070 = vmatpush1.msra.mxu0 0.0
        %1071 = vmatprep.subr.mxu0 0.0
        %1072 = vmatpush1.msra.mxu0 0.0
        %1073 = vmatprep.subr.mxu0 0.0
        %1074 = vmatpush1.msra.mxu0 0.0
        %1075 = vmatprep.subr.mxu0 0.0
        %1076 = vmatpush1.msra.mxu0 %v1040
        %1077 = vmatprep.subr.mxu0 0.0
        %1078 = vmatpush2.msra.mxu0 0.0
        %1079 = vmatprep.subr.mxu0 0.0
        %1080 = vmatpush2.msra.mxu0 0.0
        %1081 = vmatprep.subr.mxu0 0.0
        %1082 = vmatpush2.msra.mxu0 0.0
        %1083 = vmatprep.subr.mxu0 0.0
        %1084 = vmatpush2.msra.mxu0 0.0
        %1085 = vmatprep.subr.mxu0 0.0
        %1086 = vmatpush2.msra.mxu0 0.0
        %1087 = vmatprep.subr.mxu0 0.0
        %1088 = vmatpush2.msra.mxu0 0.0
        %1089 = vmatprep.subr.mxu0 0.0
        %1090 = vmatpush2.msra.mxu0 0.0
        %1091 = vmatprep.subr.mxu0 0.0
        %1092 = vmatpush2.msra.mxu0 0.0
        %1093 = vmatprep.subr.mxu0 0.0
        %1094 = vmatpush2.msra.mxu0 0.0
        %1095 = vmatprep.subr.mxu0 0.0
        %1096 = vmatpush2.msra.mxu0 0.0
        %1097 = vmatprep.subr.mxu0 0.0
        %1098 = vmatpush2.msra.mxu0 0.0
        %1099 = vmatprep.subr.mxu0 0.0
        %1100 = vmatpush2.msra.mxu0 0.0
        %1101 = vmatprep.subr.mxu0 0.0
        %1102 = vmatpush2.msra.mxu0 0.0
        %1103 = vmatprep.subr.mxu0 0.0
        %1104 = vmatpush2.msra.mxu0 0.0
        %1105 = vmatprep.subr.mxu0 0.0
        %1106 = vmatpush2.msra.mxu0 0.0
        %1107 = vmatprep.subr.mxu0 0.0
        %1108 = vmatpush2.msra.mxu0 0.0
        %1109 = vmatprep.mubr.f32.mxu0 0.0
        %1110 = vmatmul.mubr.f32.gmra.mxu0 %v1043
        %v1111 = vpop.f32.mrf.mxu0
        %v1112 = vadd.f32 0.0, %v1111
        %v1113 = vpop.f32.mrf.mxu0
        %1114 = vdwg.mxu0
        %1116 = vrot.lane.b32.xlu0 %v1112, 16
        %v1117 = vpop.permute.xlu0 %1116
        %v1119 = vadd.f32 %v1037, %v1117
        %vm1120 = vcmask 261248
        %1121 = vst.msk [vmem:[#allocation3] sm:$0xff] %vm1120, %v1119
        // Predicated region
        $region89: #{tpu_custom_call.1} parent=63 // pred_check
          %p1122 = pneg %p520
        $region90: #{tpu_custom_call.1} parent=63 // pred_check_branch
          %1124 = sbr.rel (%p1122) target = $region92
        $region91: #{tpu_custom_call.1} parent=63 // pred_region
          %v1125 = vld [vmem:[%s10] sm:$0x1]
          %v1126 = vld [vmem:[%s10 + $0x1] sm:$0x1]
          %v1127 = vld [vmem:[%s10 + $0x2] sm:$0x1]
          %v1128 = vld [vmem:[%s10 + $0x3] sm:$0x1]
          %v1129 = vld [vmem:[%s10 + $0x4] sm:$0x1]
          %v1130 = vld [vmem:[%s10 + $0x5] sm:$0x1]
          %v1131 = vld [vmem:[#allocation3] sm:$0xff]
          %v1132 = vld [vmem:[#allocation10] sm:$0xff]
          %v1133 = vld [vmem:[#allocation10 + $0x8] sm:$0xff]
          %v1134 = vld [vmem:[#allocation10 + $0x10] sm:$0xff]
          %v1135 = vld [vmem:[#allocation10 + $0x18] sm:$0xff]
          %v1136 = vlaneseq
          %v1137 = vshrl.u32 %v1136, 7
          %v1138 = vsub.s32 0, %v1137
          %v1139 = vrot.slane %v1125, %v1138
          %v1141 = vsel %vm610, %v1131, 0
          %1143 = vmatprep.subr.mxu0 0.0
          %1144 = vmatpush1.msra.mxu0 0.0
          %1145 = vmatprep.subr.mxu0 0.0
          %1146 = vmatpush1.msra.mxu0 0.0
          %1147 = vmatprep.subr.mxu0 0.0
          %1148 = vmatpush1.msra.mxu0 0.0
          %1149 = vmatprep.subr.mxu0 0.0
          %1150 = vmatpush1.msra.mxu0 0.0
          %1151 = vmatprep.subr.mxu0 0.0
          %1152 = vmatpush1.msra.mxu0 0.0
          %1153 = vmatprep.subr.mxu0 0.0
          %1154 = vmatpush1.msra.mxu0 0.0
          %1155 = vmatprep.subr.mxu0 0.0
          %1156 = vmatpush1.msra.mxu0 0.0
          %1157 = vmatprep.subr.mxu0 0.0
          %1158 = vmatpush1.msra.mxu0 0.0
          %1159 = vmatprep.subr.mxu0 0.0
          %1160 = vmatpush1.msra.mxu0 0.0
          %1161 = vmatprep.subr.mxu0 0.0
          %1162 = vmatpush1.msra.mxu0 0.0
          %1163 = vmatprep.subr.mxu0 0.0
          %1164 = vmatpush1.msra.mxu0 0.0
          %1165 = vmatprep.subr.mxu0 0.0
          %1166 = vmatpush1.msra.mxu0 0.0
          %1167 = vmatprep.subr.mxu0 0.0
          %1168 = vmatpush1.msra.mxu0 %v1135
          %1169 = vmatprep.subr.mxu0 0.0
          %1170 = vmatpush1.msra.mxu0 %v1134
          %1171 = vmatprep.subr.mxu0 0.0
          %1172 = vmatpush1.msra.mxu0 %v1133
          %1173 = vmatprep.subr.mxu0 0.0
          %1174 = vmatpush1.msra.mxu0 %v1132
          %1175 = vmatprep.subr.mxu0 0.0
          %1176 = vmatpush2.msra.mxu0 0.0
          %1177 = vmatprep.subr.mxu0 0.0
          %1178 = vmatpush2.msra.mxu0 0.0
          %1179 = vmatprep.subr.mxu0 0.0
          %1180 = vmatpush2.msra.mxu0 0.0
          %1181 = vmatprep.subr.mxu0 0.0
          %1182 = vmatpush2.msra.mxu0 0.0
          %1183 = vmatprep.subr.mxu0 0.0
          %1184 = vmatpush2.msra.mxu0 0.0
          %1185 = vmatprep.subr.mxu0 0.0
          %1186 = vmatpush2.msra.mxu0 0.0
          %1187 = vmatprep.subr.mxu0 0.0
          %1188 = vmatpush2.msra.mxu0 0.0
          %1189 = vmatprep.subr.mxu0 0.0
          %1190 = vmatpush2.msra.mxu0 0.0
          %1191 = vmatprep.subr.mxu0 0.0
          %1192 = vmatpush2.msra.mxu0 0.0
          %1193 = vmatprep.subr.mxu0 0.0
          %1194 = vmatpush2.msra.mxu0 0.0
          %1195 = vmatprep.subr.mxu0 0.0
          %1196 = vmatpush2.msra.mxu0 0.0
          %1197 = vmatprep.subr.mxu0 0.0
          %1198 = vmatpush2.msra.mxu0 0.0
          %1199 = vmatprep.subr.mxu0 0.0
          %1200 = vmatpush2.msra.mxu0 0.0
          %1201 = vmatprep.subr.mxu0 0.0
          %1202 = vmatpush2.msra.mxu0 0.0
          %1203 = vmatprep.subr.mxu0 0.0
          %1204 = vmatpush2.msra.mxu0 0.0
          %1205 = vmatprep.subr.mxu0 0.0
          %1206 = vmatpush2.msra.mxu0 0.0
          %1207 = vmatprep.mubr.f32.mxu0 0.0
          %1208 = vmatmul.mubr.f32.gmra.mxu0 %v1141
          %v1209 = vpop.f32.mrf.mxu0
          %v1210 = vadd.f32 %v1139, %v1209
          %v1211 = vpop.f32.mrf.mxu0
          %1212 = vdwg.mxu0
          %v1213 = vld [vmem:[%s454] sm:$0xff]
          %v1214 = vadd.f32 %v1210, %v1213
          %v1215 = vsel %vm610, %v1214, 0.0
          %1216 = vadd.xlane.f32.xlu0 %v1215
          %v1217 = vpop.xlane.xlu0 %1216
          %v1218 = vrcp.pop 32.0
          %v1219 = vmul.f32 %v1217, %v1218
          %v1220 = vsub.f32 %v1214, %v1219
          %v1221 = vmul.f32 %v1220, %v1220
          %v1222 = vsel %vm610, %v1221, 0.0
          %1223 = vadd.xlane.f32.xlu0 %v1222
          %v1224 = vpop.xlane.xlu0 %1223
          %v1225 = vmul.f32 %v1224, %v1218
          %v1226 = vadd.f32 %v1225, 1e-05
          %v1227 = vrsqrt.pop %v1226
          %v1228 = vmul.f32 %v1220, %v1227
          %v1229 = vlaneseq
          %v1230 = vshrl.u32 %v1229, 7
          %v1231 = vsub.s32 0, %v1230
          %v1232 = vrot.slane %v1126, %v1231
          %v1233 = vmul.f32 %v1228, %v1232
          %v1234 = vlaneseq
          %v1235 = vshrl.u32 %v1234, 7
          %v1236 = vsub.s32 0, %v1235
          %v1237 = vrot.slane %v1127, %v1236
          %v1238 = vadd.f32 %v1233, %v1237
          %v1239 = vld [vmem:[#allocation12] sm:$0xff]
          %v1240 = vld [vmem:[#allocation12 + $0x8] sm:$0xff]
          %v1241 = vld [vmem:[#allocation12 + $0x10] sm:$0xff]
          %v1242 = vld [vmem:[#allocation12 + $0x18] sm:$0xff]
          %v1243 = vld [vmem:[%s8] sm:$0x1]
          %v1245 = vlaneseq
          %v1246 = vshrl.u32 %v1245, 7
          %v1247 = vsub.s32 0, %v1246
          %v1248 = vrot.slane %v1243, %v1247
          %v1251 = vsel %vm610, %v1238, 0
          %1253 = vmatprep.subr.mxu0 0.0
          %1254 = vmatpush1.msra.mxu0 0.0
          %1255 = vmatprep.subr.mxu0 0.0
          %1256 = vmatpush1.msra.mxu0 0.0
          %1257 = vmatprep.subr.mxu0 0.0
          %1258 = vmatpush1.msra.mxu0 0.0
          %1259 = vmatprep.subr.mxu0 0.0
          %1260 = vmatpush1.msra.mxu0 0.0
          %1261 = vmatprep.subr.mxu0 0.0
          %1262 = vmatpush1.msra.mxu0 0.0
          %1263 = vmatprep.subr.mxu0 0.0
          %1264 = vmatpush1.msra.mxu0 0.0
          %1265 = vmatprep.subr.mxu0 0.0
          %1266 = vmatpush1.msra.mxu0 0.0
          %1267 = vmatprep.subr.mxu0 0.0
          %1268 = vmatpush1.msra.mxu0 0.0
          %1269 = vmatprep.subr.mxu0 0.0
          %1270 = vmatpush1.msra.mxu0 0.0
          %1271 = vmatprep.subr.mxu0 0.0
          %1272 = vmatpush1.msra.mxu0 0.0
          %1273 = vmatprep.subr.mxu0 0.0
          %1274 = vmatpush1.msra.mxu0 0.0
          %1275 = vmatprep.subr.mxu0 0.0
          %1276 = vmatpush1.msra.mxu0 0.0
          %1277 = vmatprep.subr.mxu0 0.0
          %1278 = vmatpush1.msra.mxu0 %v1242
          %1279 = vmatprep.subr.mxu0 0.0
          %1280 = vmatpush1.msra.mxu0 %v1241
          %1281 = vmatprep.subr.mxu0 0.0
          %1282 = vmatpush1.msra.mxu0 %v1240
          %1283 = vmatprep.subr.mxu0 0.0
          %1284 = vmatpush1.msra.mxu0 %v1239
          %1285 = vmatprep.subr.mxu0 0.0
          %1286 = vmatpush2.msra.mxu0 0.0
          %1287 = vmatprep.subr.mxu0 0.0
          %1288 = vmatpush2.msra.mxu0 0.0
          %1289 = vmatprep.subr.mxu0 0.0
          %1290 = vmatpush2.msra.mxu0 0.0
          %1291 = vmatprep.subr.mxu0 0.0
          %1292 = vmatpush2.msra.mxu0 0.0
          %1293 = vmatprep.subr.mxu0 0.0
          %1294 = vmatpush2.msra.mxu0 0.0
          %1295 = vmatprep.subr.mxu0 0.0
          %1296 = vmatpush2.msra.mxu0 0.0
          %1297 = vmatprep.subr.mxu0 0.0
          %1298 = vmatpush2.msra.mxu0 0.0
          %1299 = vmatprep.subr.mxu0 0.0
          %1300 = vmatpush2.msra.mxu0 0.0
          %1301 = vmatprep.subr.mxu0 0.0
          %1302 = vmatpush2.msra.mxu0 0.0
          %1303 = vmatprep.subr.mxu0 0.0
          %1304 = vmatpush2.msra.mxu0 0.0
          %1305 = vmatprep.subr.mxu0 0.0
          %1306 = vmatpush2.msra.mxu0 0.0
          %1307 = vmatprep.subr.mxu0 0.0
          %1308 = vmatpush2.msra.mxu0 0.0
          %1309 = vmatprep.subr.mxu0 0.0
          %1310 = vmatpush2.msra.mxu0 0.0
          %1311 = vmatprep.subr.mxu0 0.0
          %1312 = vmatpush2.msra.mxu0 0.0
          %1313 = vmatprep.subr.mxu0 0.0
          %1314 = vmatpush2.msra.mxu0 0.0
          %1315 = vmatprep.subr.mxu0 0.0
          %1316 = vmatpush2.msra.mxu0 0.0
          %1317 = vmatprep.mubr.f32.mxu0 0.0
          %1318 = vmatmul.mubr.f32.gmra.mxu0 %v1251
          %v1319 = vpop.f32.mrf.mxu0
          %v1320 = vadd.f32 %v1248, %v1319
          %v1321 = vpop.f32.mrf.mxu0
          %1322 = vdwg.mxu0
          %v1323 = vmax.f32 %v1320, 0.0
          %v1324 = vld [vmem:[%s9] sm:$0xff]
          %v1325 = vld [vmem:[%s9 + $0x8] sm:$0xff]
          %v1326 = vld [vmem:[%s9 + $0x10] sm:$0xff]
          %v1327 = vld [vmem:[%s9 + $0x18] sm:$0xff]
          %v1328 = vld [vmem:[%s9 + $0x20] sm:$0xff]
          %v1329 = vld [vmem:[%s9 + $0x28] sm:$0xff]
          %v1330 = vld [vmem:[%s9 + $0x30] sm:$0xff]
          %v1331 = vld [vmem:[%s9 + $0x38] sm:$0xff]
          %v1332 = vlaneseq
          %v1333 = vshrl.u32 %v1332, 7
          %v1334 = vsub.s32 0, %v1333
          %v1335 = vrot.slane %v1130, %v1334
          %vm1336 = vcmask 523264
          %v1338 = vsel %vm1336, %v1323, 0
          %1340 = vmatprep.subr.mxu0 0.0
          %1341 = vmatpush1.msra.mxu0 0.0
          %1342 = vmatprep.subr.mxu0 0.0
          %1343 = vmatpush1.msra.mxu0 0.0
          %1344 = vmatprep.subr.mxu0 0.0
          %1345 = vmatpush1.msra.mxu0 0.0
          %1346 = vmatprep.subr.mxu0 0.0
          %1347 = vmatpush1.msra.mxu0 0.0
          %1348 = vmatprep.subr.mxu0 0.0
          %1349 = vmatpush1.msra.mxu0 0.0
          %1350 = vmatprep.subr.mxu0 0.0
          %1351 = vmatpush1.msra.mxu0 0.0
          %1352 = vmatprep.subr.mxu0 0.0
          %1353 = vmatpush1.msra.mxu0 0.0
          %1354 = vmatprep.subr.mxu0 0.0
          %1355 = vmatpush1.msra.mxu0 0.0
          %1356 = vmatprep.subr.mxu0 0.0
          %1357 = vmatpush1.msra.mxu0 %v1331
          %1358 = vmatprep.subr.mxu0 0.0
          %1359 = vmatpush1.msra.mxu0 %v1330
          %1360 = vmatprep.subr.mxu0 0.0
          %1361 = vmatpush1.msra.mxu0 %v1329
          %1362 = vmatprep.subr.mxu0 0.0
          %1363 = vmatpush1.msra.mxu0 %v1328
          %1364 = vmatprep.subr.mxu0 0.0
          %1365 = vmatpush1.msra.mxu0 %v1327
          %1366 = vmatprep.subr.mxu0 0.0
          %1367 = vmatpush1.msra.mxu0 %v1326
          %1368 = vmatprep.subr.mxu0 0.0
          %1369 = vmatpush1.msra.mxu0 %v1325
          %1370 = vmatprep.subr.mxu0 0.0
          %1371 = vmatpush1.msra.mxu0 %v1324
          %1372 = vmatprep.subr.mxu0 0.0
          %1373 = vmatpush2.msra.mxu0 0.0
          %1374 = vmatprep.subr.mxu0 0.0
          %1375 = vmatpush2.msra.mxu0 0.0
          %1376 = vmatprep.subr.mxu0 0.0
          %1377 = vmatpush2.msra.mxu0 0.0
          %1378 = vmatprep.subr.mxu0 0.0
          %1379 = vmatpush2.msra.mxu0 0.0
          %1380 = vmatprep.subr.mxu0 0.0
          %1381 = vmatpush2.msra.mxu0 0.0
          %1382 = vmatprep.subr.mxu0 0.0
          %1383 = vmatpush2.msra.mxu0 0.0
          %1384 = vmatprep.subr.mxu0 0.0
          %1385 = vmatpush2.msra.mxu0 0.0
          %1386 = vmatprep.subr.mxu0 0.0
          %1387 = vmatpush2.msra.mxu0 0.0
          %1388 = vmatprep.subr.mxu0 0.0
          %1389 = vmatpush2.msra.mxu0 0.0
          %1390 = vmatprep.subr.mxu0 0.0
          %1391 = vmatpush2.msra.mxu0 0.0
          %1392 = vmatprep.subr.mxu0 0.0
          %1393 = vmatpush2.msra.mxu0 0.0
          %1394 = vmatprep.subr.mxu0 0.0
          %1395 = vmatpush2.msra.mxu0 0.0
          %1396 = vmatprep.subr.mxu0 0.0
          %1397 = vmatpush2.msra.mxu0 0.0
          %1398 = vmatprep.subr.mxu0 0.0
          %1399 = vmatpush2.msra.mxu0 0.0
          %1400 = vmatprep.subr.mxu0 0.0
          %1401 = vmatpush2.msra.mxu0 0.0
          %1402 = vmatprep.subr.mxu0 0.0
          %1403 = vmatpush2.msra.mxu0 0.0
          %1404 = vmatprep.mubr.f32.mxu0 0.0
          %1405 = vmatmul.mubr.f32.gmra.mxu0 %v1338
          %v1406 = vpop.f32.mrf.mxu0
          %v1407 = vadd.f32 %v1335, %v1406
          %v1408 = vpop.f32.mrf.mxu0
          %1409 = vdwg.mxu0
          %v1410 = vadd.f32 %v1407, %v1238
          %v1411 = vsel %vm610, %v1410, 0.0
          %1412 = vadd.xlane.f32.xlu0 %v1411
          %v1413 = vpop.xlane.xlu0 %1412
          %v1414 = vmul.f32 %v1413, %v1218
          %v1415 = vsub.f32 %v1410, %v1414
          %v1416 = vmul.f32 %v1415, %v1415
          %v1417 = vsel %vm610, %v1416, 0.0
          %1418 = vadd.xlane.f32.xlu0 %v1417
          %v1419 = vpop.xlane.xlu0 %1418
          %v1420 = vmul.f32 %v1419, %v1218
          %v1421 = vadd.f32 %v1420, 1e-05
          %v1422 = vrsqrt.pop %v1421
          %v1423 = vmul.f32 %v1415, %v1422
          %v1424 = vlaneseq
          %v1425 = vshrl.u32 %v1424, 7
          %v1426 = vsub.s32 0, %v1425
          %v1427 = vrot.slane %v1128, %v1426
          %v1428 = vmul.f32 %v1423, %v1427
          %v1429 = vlaneseq
          %v1430 = vshrl.u32 %v1429, 7
          %v1431 = vsub.s32 0, %v1430
          %v1432 = vrot.slane %v1129, %v1431
          %v1433 = vadd.f32 %v1428, %v1432
          %1434 = vst.msk [vmem:[%s519] sm:$0xff] %vm610, %v1433
        $region92: #{tpu_custom_call.1} parent=63 // pred_fallthru
          _
        %s1435 = sand.u32 %s302, 1
        %s1436 = scalar_lea.sflag [#allocation6], %s1435
        %s1437 = sand.u32 %s302, 1
        %s1438 = smul.addr %s1437, 8
        %s1439 = scalar_lea.vmem [#allocation13], %s1438
        // Predicated region
        $region93: #{tpu_custom_call.1} parent=63 // pred_check
          %p1440 = pneg %p312
        $region94: #{tpu_custom_call.1} parent=63 // pred_check_branch
          %1442 = sbr.rel (%p1440) target = $region96
        $region95: #{tpu_custom_call.1} parent=63 // pred_region
          %s1444 = ssub.s32 128, 128
          %1445 = vsyncadd %s1436, %s1444
          %s1446 = smul.addr %s36, 128
          %s1447 = scalar_lea.hbm %s11, %s1446
          %s1449 = sshll.u32 %s1439, 4
          %s1450 = int_to_ptr.vmem [resolvable:$true] %s1449
          %1452 = dma.vmem_to_hbm [thread:$0]  %s1450, 128, %s1447, %s1436
        $region96: #{tpu_custom_call.1} parent=63 // pred_fallthru
          _
      $region64: #{tpu_custom_call.1} parent=5 // pred_fallthru
        _
      %p1453 = scmp.le.s32.totalorder 2, %s27
      // Predicated region
      $region97: #{tpu_custom_call.1} parent=5 // pred_check
        %p1454 = pneg %p1453
      $region98: #{tpu_custom_call.1} parent=5 // pred_check_branch
        %1456 = sbr.rel (%p1454) target = $region100
      $region99: #{tpu_custom_call.1} parent=5 // pred_region
        %s1457 = ssub.s32 %s27, 2
        // Predicated region
        $region101: #{tpu_custom_call.1} parent=99 // pred_check
          %p1458 = pneg %p318
        $region102: #{tpu_custom_call.1} parent=99 // pred_check_branch
          %1460 = sbr.rel (%p1458) target = $region104
        $region103: #{tpu_custom_call.1} parent=99 // pred_region
          %s1461 = sand.u32 %s303, 1
          %s1462 = scalar_lea.sflag [#allocation6], %s1461
          %s1463 = sand.u32 %s303, 1
          %s1464 = smul.addr %s1463, 8
          %s1465 = scalar_lea.vmem [#allocation13], %s1464
          %1466 = dma.done %s1462, 128
        $region104: #{tpu_custom_call.1} parent=99 // pred_fallthru
          _
      $region100: #{tpu_custom_call.1} parent=5 // pred_fallthru
        _
    $region6: #{tpu_custom_call.1} parent=1 // loop_footer
      %s31 = sadd.s32 1, %s27
    $region7: #{tpu_custom_call.1} parent=1 // loop_footer_branch
      %26 = sbr.rel target = $region3
    $region8: #{tpu_custom_call.1} parent=1 // loop_exit
      _
    %1467 = vsyncpa [#allocation5], 1
    %s1468 = scalar_lea.sflag [#allocation5], 1
    %1469 = vsyncpa %s1468, 1
    %1470 = vsyncpa [#allocation8], 1
    %s1471 = scalar_lea.sflag [#allocation8], 1
    %1472 = vsyncpa %s1471, 1
    %1473 = vsyncpa [#allocation11], 1
    %1474 = vsyncpa [#allocation6], 1
    %s1475 = scalar_lea.sflag [#allocation6], 1
    %1476 = vsyncpa %s1475, 1

</llo_original>
